<compile_context>
chip_gen: v6e
topology: v6e:2x2x1
jax: 0.10.0
libtpu: 0.0.40
codegen_flags: <defaults>
</compile_context>

<pallas_src>
import functools
import math

import jax
import jax.numpy as jnp
from jax.experimental import pallas as pl
from jax.experimental.pallas import tpu as pltpu


def _sfu_kernel(C, H, W, Wf, Wfa, x4_ref, xflat_ref, dw_ref, dhr_ref, dhi_ref,
                w1t_ref, w2t_ref, o_ref):
    bt = x4_ref.shape[0]
    mt = bt * C
    NfP = dw_ref.shape[1]
    cdt = dw_ref.dtype                 # DFT matmul input dtype (bf16 default)

    # ---- stage 1: contract W against the fused [Dwr | Dwi] factor (1 matmul) ----
    x2 = x4_ref[...].reshape(mt * H, W).astype(cdt)         # leading-dim collapse (free)
    y = jnp.dot(x2, dw_ref[...], preferred_element_type=jnp.float32)   # (mt*H, NfP)

    # ---- stage 2: contract H with two large-M matmuls (no per-batch Dh copy) ----
    # Per-(b,c) transpose puts H in the minor/contraction dim; the fused (m, f)
    # rows form one big MXU M dimension.  Dh is symmetric, so Yt @ Dh equals
    # (Dh @ Y)^T with the H-spectral index k in the minor dim.
    yt = jnp.swapaxes(y.reshape(mt, H, NfP), 1, 2)          # (mt, NfP, H)
    yt2 = yt.reshape(mt * NfP, H).astype(cdt)               # leading-dim collapse (free)
    a = jnp.dot(yt2, dhr_ref[...], preferred_element_type=jnp.float32)  # (mt*NfP, H)
    b = jnp.dot(yt2, dhi_ref[...], preferred_element_type=jnp.float32)
    a3 = a.reshape(mt, NfP, H)         # f-rows: [Re block | pad | Im block | pad]
    b3 = b.reshape(mt, NfP, H)

    # ---- complex combine + spectral amplitude, kept in (m, f, k) order ----
    fr = a3[:, :Wf, :] - b3[:, Wfa:Wfa + Wf, :]             # (mt, Wf, H)
    fi = b3[:, :Wf, :] + a3[:, Wfa:Wfa + Wf, :]
    amp = jnp.sqrt(fr * fr + fi * fi)

    # Global average over the (H, Wf) spectrum; permutation-invariant so no
    # transpose back.  True divisor H*Wf.
    amp4 = amp.reshape(bt, C, Wf, H)                        # leading-dim split (free)
    v = jnp.sum(jnp.sum(amp4, axis=3), axis=2) * (1.0 / (H * Wf))   # (bt, C)

    # ---- squeeze-excite MLP, batched over bt (f32) ----
    hmid = jnp.maximum(
        jnp.dot(v, w1t_ref[...], preferred_element_type=jnp.float32), 0.0)
    s = jax.nn.sigmoid(
        jnp.dot(hmid, w2t_ref[...], preferred_element_type=jnp.float32))

    # irfft2(w * rfft2(x)) == w * x (w is a positive real per-(b,c) scalar), so the
    # output is a lane-dense gated copy of x, re-read here so the f32 x block is
    # not held live across the matmul/amp region.
    o_ref[...] = (xflat_ref[...] * s[:, :, None]).astype(o_ref.dtype)


def _dft_matrices(H, W, Wf, Wfa, NfP, dtype):
    """Separable ortho-normalized real-DFT factors.

    dw  : (W, NfP) columns [0,Wf) = Re, [Wfa, Wfa+Wf) = Im, rest exactly zero.
    dhr : (H, H)   real part of the (symmetric) length-H DFT matrix.
    dhi : (H, H)   imaginary part.
    """
    w = jnp.arange(W, dtype=jnp.float32)
    kw = jnp.arange(Wf, dtype=jnp.float32)
    ang_w = (-2.0 * jnp.pi / W) * (w[:, None] * kw[None, :])
    sw = 1.0 / math.sqrt(W)
    dw = jnp.zeros((W, NfP), jnp.float32)
    dw = dw.at[:, :Wf].set(jnp.cos(ang_w) * sw)
    dw = dw.at[:, Wfa:Wfa + Wf].set(jnp.sin(ang_w) * sw)

    h = jnp.arange(H, dtype=jnp.float32)
    ang_h = (-2.0 * jnp.pi / H) * (h[:, None] * h[None, :])
    sh = 1.0 / math.sqrt(H)
    dhr = jnp.cos(ang_h) * sh
    dhi = jnp.sin(ang_h) * sh
    return dw.astype(dtype), dhr.astype(dtype), dhi.astype(dtype)


def _vmem_capacity_bytes():
    try:
        return int(pltpu.get_tpu_info().vmem_capacity_bytes)
    except Exception:  # conservative fallback (v7x has 64 MiB per TensorCore)
        return 64 * 1024 * 1024


def _pick_batch_tile(B, C, H, W, NfP, vmem_budget_bytes):
    """Largest whole-batch tile whose per-step footprint fits the VMEM budget.

    Tiles are whole batches only (the SE-MLP mixes channels within a batch) and
    there is no forced grid split: on single-TC chips the grid is a sequential
    loop, so a bigger resident block is free headroom.
    """
    w_lanes = 128 * ((W + 127) // 128)
    per_batch = C * 4 * (
        2 * H * w_lanes      # (bt, C, H, W) DFT-path input block, double-buffered
        + 4 * H * W          # lane-dense x copy + output block, double-buffered
        + 6 * H * NfP        # y / yt / a / b / fr / fi / amp intermediates (f32)
    )
    bt = max(1, min(B, int(vmem_budget_bytes // max(per_batch, 1))))
    while B % bt:
        bt -= 1
    return bt


@functools.partial(jax.jit, static_argnums=(3, 4, 5))
def _sfu_call(x, w1, w2, dft_dtype, bt, vmem_limit_bytes):
    B, C, H, W = x.shape
    Wf = W // 2 + 1
    Wfa = 8 * ((Wf + 7) // 8)                  # 8-aligned offset of the Im block
    NfP = 128 * ((2 * Wfa + 127) // 128)       # lane-dense fused spectral width
    hidden = w1.shape[0]

    dw, dhr, dhi = _dft_matrices(H, W, Wf, Wfa, NfP, dft_dtype)  # folded under jit
    w1t = w1.T.astype(jnp.float32)             # (C, hidden)
    w2t = w2.T.astype(jnp.float32)             # (hidden, C)
    x_flat = x.reshape(B, C, H * W)            # free in HBM; lane-dense I/O view

    kernel = functools.partial(_sfu_kernel, C, H, W, Wf, Wfa)
    grid = (B // bt,)

    out_flat = pl.pallas_call(
        kernel,
        out_shape=jax.ShapeDtypeStruct((B, C, H * W), x.dtype),
        grid=grid,
        in_specs=[
            pl.BlockSpec((bt, C, H, W), lambda i: (i, 0, 0, 0)),    # DFT path
            pl.BlockSpec((bt, C, H * W), lambda i: (i, 0, 0)),      # gating path
            pl.BlockSpec((W, NfP), lambda i: (0, 0)),
            pl.BlockSpec((H, H), lambda i: (0, 0)),
            pl.BlockSpec((H, H), lambda i: (0, 0)),
            pl.BlockSpec((C, hidden), lambda i: (0, 0)),
            pl.BlockSpec((hidden, C), lambda i: (0, 0)),
        ],
        out_specs=pl.BlockSpec((bt, C, H * W), lambda i: (i, 0, 0)),
        compiler_params=pltpu.CompilerParams(
            dimension_semantics=("parallel",),
            vmem_limit_bytes=vmem_limit_bytes,
        ),
    )(x, x_flat, dw, dhr, dhi, w1t, w2t)
    return out_flat.reshape(B, C, H, W)


def sfu_forward(x, w1, w2, dft_dtype=jnp.bfloat16):
    """SFU forward.  dft_dtype is the MXU input dtype for the DFT matmuls
    (bf16-native on v5e/v6e/v7x MXUs; accumulation is always f32)."""
    B, C, H, W = x.shape
    Wf = W // 2 + 1
    Wfa = 8 * ((Wf + 7) // 8)
    NfP = 128 * ((2 * Wfa + 127) // 128)

    vmem_cap = _vmem_capacity_bytes()
    # Leave pipeline headroom below physical VMEM (v7x: 64 MiB -> ~52 MiB;
    # v5e/v6e: 128 MiB -> 100 MiB).
    vmem_limit = int(min(vmem_cap - 12 * 1024 * 1024, 100 * 1024 * 1024))
    bt = _pick_batch_tile(B, C, H, W, NfP, int(0.7 * vmem_limit))
    return _sfu_call(x, w1, w2, dft_dtype, bt, vmem_limit)


def sfu_reference(x, w1, w2):
    """Pure-JAX reference replicating the PyTorch forward literally."""
    fft = jnp.fft.rfft2(x, norm="ortho")
    amp = jnp.abs(fft)
    v = amp.mean(axis=(-2, -1))                      # (B, C)
    h = jax.nn.relu(v @ w1.T)
    s = jax.nn.sigmoid(h @ w2.T)
    w = s[:, :, None, None]
    fft_mod = (amp * w) * jnp.exp(1j * jnp.angle(fft))
    return jnp.fft.irfft2(fft_mod, s=x.shape[-2:], norm="ortho")


if __name__ == "__main__":
    B, C, H, W = 2, 4, 16, 16
    reduction = 16
    hidden = max(C // reduction, 4)

    key = jax.random.PRNGKey(0)
    kx, k1, k2 = jax.random.split(key, 3)
    x = jax.random.normal(kx, (B, C, H, W), dtype=jnp.float32)

    # Deterministic init mimicking nn.Linear default (uniform, bound = 1/sqrt(fan_in)).
    b1 = 1.0 / math.sqrt(C)
    w1 = jax.random.uniform(k1, (hidden, C), minval=-b1, maxval=b1, dtype=jnp.float32)
    b2 = 1.0 / math.sqrt(hidden)
    w2 = jax.random.uniform(k2, (C, hidden), minval=-b2, maxval=b2, dtype=jnp.float32)

    out = sfu_forward(x, w1, w2)
    out = jax.block_until_ready(out)

    ref = sfu_reference(x, w1, w2)
    assert out.shape == (B, C, H, W)
    # bf16 MXU inputs on the DFT path -> loosened tolerance on the final gated
    # output (the gate goes through a mean + sigmoid, so errors stay small).
    max_err = float(jnp.max(jnp.abs(out - ref)))
    assert jnp.allclose(out, ref, rtol=2e-2, atol=2e-2), f"max abs err {max_err}"

    print("KERNEL_OK")
</pallas_src>

<mosaic_0001>
module attributes {stable_mosaic.version = 11 : i64} {
  func.func @_sfu_kernel(%arg0: i32, %arg1: memref<2x4x16x16xf32, #tpu.memory_space<vmem>>, %arg2: memref<2x4x256xf32, #tpu.memory_space<vmem>>, %arg3: memref<16x128xbf16, #tpu.memory_space<vmem>>, %arg4: memref<16x16xbf16, #tpu.memory_space<vmem>>, %arg5: memref<16x16xbf16, #tpu.memory_space<vmem>>, %arg6: memref<4x4xf32, #tpu.memory_space<vmem>>, %arg7: memref<4x4xf32, #tpu.memory_space<vmem>>, %arg8: memref<2x4x256xf32, #tpu.memory_space<vmem>>) attributes {dimension_semantics = [#tpu.dimension_semantics<parallel>], iteration_bounds = array<i64: 1>, scalar_prefetch = 0 : i64, scratch_operands = 0 : i64, tpu.core_type = #tpu.core_type<tc>, window_params = [{transform_indices = @transform_0, window_bounds = array<i64: 2, 4, 16, 16>}, {transform_indices = @transform_1, window_bounds = array<i64: 2, 4, 256>}, {pipeline_mode = #tpu.pipeline_mode<synchronous>, transform_indices = @transform_2, window_bounds = array<i64: 16, 128>}, {pipeline_mode = #tpu.pipeline_mode<synchronous>, transform_indices = @transform_3, window_bounds = array<i64: 16, 16>}, {pipeline_mode = #tpu.pipeline_mode<synchronous>, transform_indices = @transform_4, window_bounds = array<i64: 16, 16>}, {pipeline_mode = #tpu.pipeline_mode<synchronous>, transform_indices = @transform_5, window_bounds = array<i64: 4, 4>}, {pipeline_mode = #tpu.pipeline_mode<synchronous>, transform_indices = @transform_6, window_bounds = array<i64: 4, 4>}, {transform_indices = @transform_7, window_bounds = array<i64: 2, 4, 256>}]} {
    %c0 = arith.constant 0 : index
    %c0_0 = arith.constant 0 : index
    %c0_1 = arith.constant 0 : index
    %c0_2 = arith.constant 0 : index
    %0 = vector.load %arg1[%c0, %c0_0, %c0_1, %c0_2] : memref<2x4x16x16xf32, #tpu.memory_space<vmem>>, vector<2x4x16x16xf32>
    %1 = vector.shape_cast %0 : vector<2x4x16x16xf32> to vector<128x16xf32>
    %2 = arith.truncf %1 : vector<128x16xf32> to vector<128x16xbf16>
    %c0_3 = arith.constant 0 : index
    %c0_4 = arith.constant 0 : index
    %3 = vector.load %arg3[%c0_3, %c0_4] : memref<16x128xbf16, #tpu.memory_space<vmem>>, vector<16x128xbf16>
    %cst = arith.constant dense<0.000000e+00> : vector<128x128xf32>
    %4 = tpu.matmul %2, %3, %cst {dimension_numbers = #tpu.dot_dimension_numbers<[1], [0], [0], [1], [0, 0, 1, 1], [], []>} : vector<128x16xbf16>, vector<16x128xbf16>, vector<128x128xf32> -> vector<128x128xf32>
    %5 = vector.shape_cast %4 : vector<128x128xf32> to vector<8x16x128xf32>
    %6 = tpu.transpose %5, [0, 2, 1] : vector<8x16x128xf32> -> vector<8x128x16xf32>
    %7 = vector.shape_cast %6 : vector<8x128x16xf32> to vector<1024x16xf32>
    %8 = arith.truncf %7 : vector<1024x16xf32> to vector<1024x16xbf16>
    %c0_5 = arith.constant 0 : index
    %c0_6 = arith.constant 0 : index
    %9 = vector.load %arg4[%c0_5, %c0_6] : memref<16x16xbf16, #tpu.memory_space<vmem>>, vector<16x16xbf16>
    %cst_7 = arith.constant dense<0.000000e+00> : vector<1024x16xf32>
    %10 = tpu.matmul %8, %9, %cst_7 {dimension_numbers = #tpu.dot_dimension_numbers<[1], [0], [0], [1], [0, 0, 1, 1], [], []>} : vector<1024x16xbf16>, vector<16x16xbf16>, vector<1024x16xf32> -> vector<1024x16xf32>
    %c0_8 = arith.constant 0 : index
    %c0_9 = arith.constant 0 : index
    %11 = vector.load %arg5[%c0_8, %c0_9] : memref<16x16xbf16, #tpu.memory_space<vmem>>, vector<16x16xbf16>
    %cst_10 = arith.constant dense<0.000000e+00> : vector<1024x16xf32>
    %12 = tpu.matmul %8, %11, %cst_10 {dimension_numbers = #tpu.dot_dimension_numbers<[1], [0], [0], [1], [0, 0, 1, 1], [], []>} : vector<1024x16xbf16>, vector<16x16xbf16>, vector<1024x16xf32> -> vector<1024x16xf32>
    %13 = vector.shape_cast %10 : vector<1024x16xf32> to vector<8x128x16xf32>
    %14 = vector.shape_cast %12 : vector<1024x16xf32> to vector<8x128x16xf32>
    %15 = vector.extract_strided_slice %13 {offsets = [0, 0, 0], sizes = [8, 9, 16], strides = [1, 1, 1]} : vector<8x128x16xf32> to vector<8x9x16xf32>
    %16 = vector.extract_strided_slice %14 {offsets = [0, 16, 0], sizes = [8, 9, 16], strides = [1, 1, 1]} : vector<8x128x16xf32> to vector<8x9x16xf32>
    %17 = arith.subf %15, %16 : vector<8x9x16xf32>
    %18 = vector.extract_strided_slice %14 {offsets = [0, 0, 0], sizes = [8, 9, 16], strides = [1, 1, 1]} : vector<8x128x16xf32> to vector<8x9x16xf32>
    %19 = vector.extract_strided_slice %13 {offsets = [0, 16, 0], sizes = [8, 9, 16], strides = [1, 1, 1]} : vector<8x128x16xf32> to vector<8x9x16xf32>
    %20 = arith.addf %18, %19 : vector<8x9x16xf32>
    %21 = arith.mulf %17, %17 : vector<8x9x16xf32>
    %22 = arith.mulf %20, %20 : vector<8x9x16xf32>
    %23 = arith.addf %21, %22 : vector<8x9x16xf32>
    %24 = math.sqrt %23 : vector<8x9x16xf32>
    %25 = vector.shape_cast %24 : vector<8x9x16xf32> to vector<2x4x9x16xf32>
    %cst_11 = arith.constant dense<0.000000e+00> : vector<2x4x9xf32>
    %26 = vector.multi_reduction <add>, %25, %cst_11 [3] : vector<2x4x9x16xf32> to vector<2x4x9xf32>
    %cst_12 = arith.constant dense<0.000000e+00> : vector<2x4xf32>
    %27 = vector.multi_reduction <add>, %26, %cst_12 [2] : vector<2x4x9xf32> to vector<2x4xf32>
    %cst_13 = arith.constant 0.0069444445 : f32
    %28 = vector.broadcast %cst_13 : f32 to vector<2x4xf32>
    %29 = arith.mulf %27, %28 : vector<2x4xf32>
    %c0_14 = arith.constant 0 : index
    %c0_15 = arith.constant 0 : index
    %30 = vector.load %arg6[%c0_14, %c0_15] : memref<4x4xf32, #tpu.memory_space<vmem>>, vector<4x4xf32>
    %cst_16 = arith.constant dense<0.000000e+00> : vector<2x4xf32>
    %31 = tpu.matmul %29, %30, %cst_16 {dimension_numbers = #tpu.dot_dimension_numbers<[1], [0], [0], [1], [0, 0, 1, 1], [], []>} : vector<2x4xf32>, vector<4x4xf32>, vector<2x4xf32> -> vector<2x4xf32>
    %cst_17 = arith.constant 0.000000e+00 : f32
    %32 = vector.broadcast %cst_17 : f32 to vector<2x4xf32>
    %33 = arith.maximumf %31, %32 : vector<2x4xf32>
    %c0_18 = arith.constant 0 : index
    %c0_19 = arith.constant 0 : index
    %34 = vector.load %arg7[%c0_18, %c0_19] : memref<4x4xf32, #tpu.memory_space<vmem>>, vector<4x4xf32>
    %cst_20 = arith.constant dense<0.000000e+00> : vector<2x4xf32>
    %35 = tpu.matmul %33, %34, %cst_20 {dimension_numbers = #tpu.dot_dimension_numbers<[1], [0], [0], [1], [0, 0, 1, 1], [], []>} : vector<2x4xf32>, vector<4x4xf32>, vector<2x4xf32> -> vector<2x4xf32>
    %36 = arith.negf %35 : vector<2x4xf32>
    %37 = math.exp %36 : vector<2x4xf32>
    %cst_21 = arith.constant 1.000000e+00 : f32
    %38 = vector.broadcast %cst_21 : f32 to vector<2x4xf32>
    %39 = arith.addf %38, %37 : vector<2x4xf32>
    %40 = arith.divf %38, %39 : vector<2x4xf32>
    %c0_22 = arith.constant 0 : index
    %c0_23 = arith.constant 0 : index
    %c0_24 = arith.constant 0 : index
    %41 = vector.load %arg2[%c0_22, %c0_23, %c0_24] : memref<2x4x256xf32, #tpu.memory_space<vmem>>, vector<2x4x256xf32>
    %42 = vector.shape_cast %40 : vector<2x4xf32> to vector<2x4x1xf32>
    %43 = vector.broadcast %42 : vector<2x4x1xf32> to vector<2x4x256xf32>
    %44 = arith.mulf %41, %43 : vector<2x4x256xf32>
    %c0_25 = arith.constant 0 : index
    %c0_26 = arith.constant 0 : index
    %c0_27 = arith.constant 0 : index
    %45 = vector.load %arg8[%c0_25, %c0_26, %c0_27] : memref<2x4x256xf32, #tpu.memory_space<vmem>>, vector<2x4x256xf32>
    tpu.vector_store %arg8[%c0_25, %c0_26, %c0_27], %44 {strides = array<i32>} : memref<2x4x256xf32, #tpu.memory_space<vmem>>, vector<2x4x256xf32>,
    return
  }
  func.func @transform_0(%arg0: i32) -> (i32, i32, i32, i32) {
    %c0_i32 = arith.constant 0 : i32
    %c0_i32_0 = arith.constant 0 : i32
    %c0_i32_1 = arith.constant 0 : i32
    %c0_i32_2 = arith.constant 0 : i32
    return %arg0, %c0_i32, %c0_i32_0, %c0_i32_1 : i32, i32, i32, i32
  }
  func.func @transform_1(%arg0: i32) -> (i32, i32, i32) {
    %c0_i32 = arith.constant 0 : i32
    %c0_i32_0 = arith.constant 0 : i32
    %c0_i32_1 = arith.constant 0 : i32
    return %arg0, %c0_i32, %c0_i32_0 : i32, i32, i32
  }
  func.func @transform_2(%arg0: i32) -> (i32, i32) {
    %c0_i32 = arith.constant 0 : i32
    %c0_i32_0 = arith.constant 0 : i32
    %c0_i32_1 = arith.constant 0 : i32
    return %c0_i32, %c0_i32_0 : i32, i32
  }
  func.func @transform_3(%arg0: i32) -> (i32, i32) {
    %c0_i32 = arith.constant 0 : i32
    %c0_i32_0 = arith.constant 0 : i32
    %c0_i32_1 = arith.constant 0 : i32
    return %c0_i32, %c0_i32_0 : i32, i32
  }
  func.func @transform_4(%arg0: i32) -> (i32, i32) {
    %c0_i32 = arith.constant 0 : i32
    %c0_i32_0 = arith.constant 0 : i32
    %c0_i32_1 = arith.constant 0 : i32
    return %c0_i32, %c0_i32_0 : i32, i32
  }
  func.func @transform_5(%arg0: i32) -> (i32, i32) {
    %c0_i32 = arith.constant 0 : i32
    %c0_i32_0 = arith.constant 0 : i32
    %c0_i32_1 = arith.constant 0 : i32
    return %c0_i32, %c0_i32_0 : i32, i32
  }
  func.func @transform_6(%arg0: i32) -> (i32, i32) {
    %c0_i32 = arith.constant 0 : i32
    %c0_i32_0 = arith.constant 0 : i32
    %c0_i32_1 = arith.constant 0 : i32
    return %c0_i32, %c0_i32_0 : i32, i32
  }
  func.func @transform_7(%arg0: i32) -> (i32, i32, i32) {
    %c0_i32 = arith.constant 0 : i32
    %c0_i32_0 = arith.constant 0 : i32
    %c0_i32_1 = arith.constant 0 : i32
    return %arg0, %c0_i32, %c0_i32_0 : i32, i32, i32
  }
}

</mosaic_0001>

<llo_original>
// kernel: _sfu_call.1
$region0: #{_sfu_call.1}
  #allocation0 [shape = 'u32[]', space=smem, size = 0x4, offset = 0x4, fixed_abs, tag = 'smem constant byte address 0x4 - core index']
  #allocation1 [shape = 'u32[144,128]{1,0:T(1,128)}', space=vmem, size = 0x12000, scoped, tag = 'internal scratch']
  %s0 = inlined_call_operand.vmem [shape: f32[2,4,16,16], index: 0, kind: input, shape index: {}]
  %s1 = inlined_call_operand.vmem [shape: f32[2,4,256], index: 1, kind: input, shape index: {}]
  %s2 = inlined_call_operand.vmem [shape: bf16[16,128], index: 2, kind: input, shape index: {}]
  %s3 = inlined_call_operand.vmem [shape: bf16[16,16], index: 3, kind: input, shape index: {}]
  %s4 = inlined_call_operand.vmem [shape: bf16[16,16], index: 4, kind: input, shape index: {}]
  %s5 = inlined_call_operand.vmem [shape: f32[4,4], index: 5, kind: input, shape index: {}]
  %s6 = inlined_call_operand.vmem [shape: f32[4,4], index: 6, kind: input, shape index: {}]
  %s7 = inlined_call_operand.vmem [shape: f32[2,4,256], index: 7, kind: output, shape index: {}]
  %s8 = sld [smem:[#allocation0]]
  $region38: #{_sfu_call.1} parent=0
    _
  %s10 = ssub.s32 1, %s8
  %s11 = scalar_select 0, %s10, %s8
  // Predicated region
  $region2: #{_sfu_call.1} parent=0 // pred_check
    _
  $region3: #{_sfu_call.1} parent=0 // pred_check_branch
    %13 = sbr.rel (0) target = $region5
  $region4: #{_sfu_call.1} parent=0 // pred_region
    _
  $region5: #{_sfu_call.1} parent=0 // pred_fallthru
    _
  // Predicated region
  $region6: #{_sfu_call.1} parent=0 // pred_check
    _
  $region7: #{_sfu_call.1} parent=0 // pred_check_branch
    %15 = sbr.rel (0) target = $region9
  $region8: #{_sfu_call.1} parent=0 // pred_region
    _
  $region9: #{_sfu_call.1} parent=0 // pred_fallthru
    _
  // Predicated region
  $region10: #{_sfu_call.1} parent=0 // pred_check
    _
  $region11: #{_sfu_call.1} parent=0 // pred_check_branch
    %17 = sbr.rel (0) target = $region13
  $region12: #{_sfu_call.1} parent=0 // pred_region
    _
  $region13: #{_sfu_call.1} parent=0 // pred_fallthru
    _
  // Predicated region
  $region14: #{_sfu_call.1} parent=0 // pred_check
    _
  $region15: #{_sfu_call.1} parent=0 // pred_check_branch
    %19 = sbr.rel (0) target = $region17
  $region16: #{_sfu_call.1} parent=0 // pred_region
    _
  $region17: #{_sfu_call.1} parent=0 // pred_fallthru
    _
  // Predicated region
  $region18: #{_sfu_call.1} parent=0 // pred_check
    _
  $region19: #{_sfu_call.1} parent=0 // pred_check_branch
    %21 = sbr.rel (0) target = $region21
  $region20: #{_sfu_call.1} parent=0 // pred_region
    _
  $region21: #{_sfu_call.1} parent=0 // pred_fallthru
    _
  // Predicated region
  $region22: #{_sfu_call.1} parent=0 // pred_check
    _
  $region23: #{_sfu_call.1} parent=0 // pred_check_branch
    %23 = sbr.rel (0) target = $region25
  $region24: #{_sfu_call.1} parent=0 // pred_region
    _
  $region25: #{_sfu_call.1} parent=0 // pred_fallthru
    _
  // Predicated region
  $region26: #{_sfu_call.1} parent=0 // pred_check
    _
  $region27: #{_sfu_call.1} parent=0 // pred_check_branch
    %25 = sbr.rel (0) target = $region29
  $region28: #{_sfu_call.1} parent=0 // pred_region
    _
  $region29: #{_sfu_call.1} parent=0 // pred_fallthru
    _
  %v27 = vld [vmem:[%s0] sm:$0xff]
  %v28 = vld [vmem:[%s0 + $0x8] sm:$0xff]
  %v29 = vld [vmem:[%s0 + $0x10] sm:$0xff]
  %v30 = vld [vmem:[%s0 + $0x18] sm:$0xff]
  %v31 = vld [vmem:[%s0 + $0x20] sm:$0xff]
  %v32 = vld [vmem:[%s0 + $0x28] sm:$0xff]
  %v33 = vld [vmem:[%s0 + $0x30] sm:$0xff]
  %v34 = vld [vmem:[%s0 + $0x38] sm:$0xff]
  %v35 = vld [vmem:[%s0 + $0x40] sm:$0xff]
  %v36 = vld [vmem:[%s0 + $0x48] sm:$0xff]
  %v37 = vld [vmem:[%s0 + $0x50] sm:$0xff]
  %v38 = vld [vmem:[%s0 + $0x58] sm:$0xff]
  %v39 = vld [vmem:[%s0 + $0x60] sm:$0xff]
  %v40 = vld [vmem:[%s0 + $0x68] sm:$0xff]
  %v41 = vld [vmem:[%s0 + $0x70] sm:$0xff]
  %v42 = vld [vmem:[%s0 + $0x78] sm:$0xff]
  %v43 = vpack.c.bf16 %v28, %v27
  %v44 = vpack.c.bf16 %v30, %v29
  %v45 = vpack.c.bf16 %v32, %v31
  %v46 = vpack.c.bf16 %v34, %v33
  %v47 = vpack.c.bf16 %v36, %v35
  %v48 = vpack.c.bf16 %v38, %v37
  %v49 = vpack.c.bf16 %v40, %v39
  %v50 = vpack.c.bf16 %v42, %v41
  %v51 = vld [vmem:[%s2] sm:$0xf]
  %v52 = vld [vmem:[%s2 + $0x4] sm:$0xf]
  %v55 = vunpack.c.l.b16 %v51
  %v56 = vunpack.c.l.b16 %v52
  %v57 = vpack.c.b16 %v56, %v55
  %vm59 = vcmask 130048
  %v61 = vsel %vm59, %v43, 0
  %v64 = vsel %vm59, %v44, 0
  %v67 = vsel %vm59, %v45, 0
  %v70 = vsel %vm59, %v46, 0
  %v73 = vsel %vm59, %v47, 0
  %v76 = vsel %vm59, %v48, 0
  %v79 = vsel %vm59, %v49, 0
  %v82 = vsel %vm59, %v50, 0
  %84 = vmatprep.subr.bf16.mxu0 0
  %85 = vmatpush1.bf16.msra.mxu0 0
  %86 = vmatprep.subr.bf16.mxu0 0
  %87 = vmatpush1.bf16.msra.mxu0 0
  %88 = vmatprep.subr.bf16.mxu0 0
  %89 = vmatpush1.bf16.msra.mxu0 0
  %90 = vmatprep.subr.bf16.mxu0 0
  %91 = vmatpush1.bf16.msra.mxu0 0
  %92 = vmatprep.subr.bf16.mxu0 0
  %93 = vmatpush1.bf16.msra.mxu0 0
  %94 = vmatprep.subr.bf16.mxu0 0
  %95 = vmatpush1.bf16.msra.mxu0 0
  %96 = vmatprep.subr.bf16.mxu0 0
  %97 = vmatpush1.bf16.msra.mxu0 0
  %98 = vmatprep.subr.bf16.mxu0 0
  %99 = vmatpush1.bf16.msra.mxu0 %v57
  %100 = vmatprep.subr.bf16.mxu0 0
  %101 = vmatpush2.bf16.msra.mxu0 0
  %102 = vmatprep.subr.bf16.mxu0 0
  %103 = vmatpush2.bf16.msra.mxu0 0
  %104 = vmatprep.subr.bf16.mxu0 0
  %105 = vmatpush2.bf16.msra.mxu0 0
  %106 = vmatprep.subr.bf16.mxu0 0
  %107 = vmatpush2.bf16.msra.mxu0 0
  %108 = vmatprep.subr.bf16.mxu0 0
  %109 = vmatpush2.bf16.msra.mxu0 0
  %110 = vmatprep.subr.bf16.mxu0 0
  %111 = vmatpush2.bf16.msra.mxu0 0
  %112 = vmatprep.subr.bf16.mxu0 0
  %113 = vmatpush2.bf16.msra.mxu0 0
  %114 = vmatprep.subr.bf16.mxu0 0
  %115 = vmatpush2.bf16.msra.mxu0 0
  %116 = vmatprep.mubr.bf16.mxu0 0
  %117 = vmatmul.mubr.bf16.gmra.mxu0 %v61
  %v118 = vpop.f32.mrf.mxu0
  %v119 = vadd.f32 0.0, %v118
  %v120 = vpop.f32.mrf.mxu0
  %v121 = vpop.f32.mrf.mxu0
  %v122 = vadd.f32 0.0, %v121
  %v123 = vpop.f32.mrf.mxu0
  %124 = vmatprep.mubr.bf16.mxu0 0
  %125 = vmatmul.mubr.bf16.gmra.mxu0 %v64
  %v126 = vpop.f32.mrf.mxu0
  %v127 = vadd.f32 0.0, %v126
  %v128 = vpop.f32.mrf.mxu0
  %v129 = vpop.f32.mrf.mxu0
  %v130 = vadd.f32 0.0, %v129
  %v131 = vpop.f32.mrf.mxu0
  %132 = vmatprep.mubr.bf16.mxu0 0
  %133 = vmatmul.mubr.bf16.gmra.mxu0 %v67
  %v134 = vpop.f32.mrf.mxu0
  %v135 = vadd.f32 0.0, %v134
  %v136 = vpop.f32.mrf.mxu0
  %v137 = vpop.f32.mrf.mxu0
  %v138 = vadd.f32 0.0, %v137
  %v139 = vpop.f32.mrf.mxu0
  %140 = vmatprep.mubr.bf16.mxu0 0
  %141 = vmatmul.mubr.bf16.gmra.mxu0 %v70
  %v142 = vpop.f32.mrf.mxu0
  %v143 = vadd.f32 0.0, %v142
  %v144 = vpop.f32.mrf.mxu0
  %v145 = vpop.f32.mrf.mxu0
  %v146 = vadd.f32 0.0, %v145
  %v147 = vpop.f32.mrf.mxu0
  %148 = vmatprep.mubr.bf16.mxu0 0
  %149 = vmatmul.mubr.bf16.gmra.mxu0 %v73
  %v150 = vpop.f32.mrf.mxu0
  %v151 = vadd.f32 0.0, %v150
  %v152 = vpop.f32.mrf.mxu0
  %v153 = vpop.f32.mrf.mxu0
  %v154 = vadd.f32 0.0, %v153
  %v155 = vpop.f32.mrf.mxu0
  %156 = vmatprep.mubr.bf16.mxu0 0
  %157 = vmatmul.mubr.bf16.gmra.mxu0 %v76
  %v158 = vpop.f32.mrf.mxu0
  %v159 = vadd.f32 0.0, %v158
  %v160 = vpop.f32.mrf.mxu0
  %v161 = vpop.f32.mrf.mxu0
  %v162 = vadd.f32 0.0, %v161
  %v163 = vpop.f32.mrf.mxu0
  %164 = vmatprep.mubr.bf16.mxu0 0
  %165 = vmatmul.mubr.bf16.gmra.mxu0 %v79
  %v166 = vpop.f32.mrf.mxu0
  %v167 = vadd.f32 0.0, %v166
  %v168 = vpop.f32.mrf.mxu0
  %v169 = vpop.f32.mrf.mxu0
  %v170 = vadd.f32 0.0, %v169
  %v171 = vpop.f32.mrf.mxu0
  %172 = vmatprep.mubr.bf16.mxu0 0
  %173 = vmatmul.mubr.bf16.gmra.mxu0 %v82
  %v174 = vpop.f32.mrf.mxu0
  %v175 = vadd.f32 0.0, %v174
  %v176 = vpop.f32.mrf.mxu0
  %v177 = vpop.f32.mrf.mxu0
  %v178 = vadd.f32 0.0, %v177
  %v179 = vpop.f32.mrf.mxu0
  %180 = vdwg.mxu0
  %181 = vxpose.xlu0.b32.start [1/16] %v119, 128
  %182 = vxpose.xlu0.b32.cont [2/16] %v122, 128
  %183 = vxpose.xlu0.b32.cont [3/16] 0.0, 128
  %184 = vxpose.xlu0.b32.cont [4/16] 0.0, 128
  %185 = vxpose.xlu0.b32.cont [5/16] 0.0, 128
  %186 = vxpose.xlu0.b32.cont [6/16] 0.0, 128
  %187 = vxpose.xlu0.b32.cont [7/16] 0.0, 128
  %188 = vxpose.xlu0.b32.cont [8/16] 0.0, 128
  %189 = vxpose.xlu0.b32.cont [9/16] 0.0, 128
  %190 = vxpose.xlu0.b32.cont [10/16] 0.0, 128
  %191 = vxpose.xlu0.b32.cont [11/16] 0.0, 128
  %192 = vxpose.xlu0.b32.cont [12/16] 0.0, 128
  %193 = vxpose.xlu0.b32.cont [13/16] 0.0, 128
  %194 = vxpose.xlu0.b32.cont [14/16] 0.0, 128
  %195 = vxpose.xlu0.b32.cont [15/16] 0.0, 128
  %196 = vxpose.xlu0.b32.end [16/16] 0.0, 128
  %v197 = vpop.trf.xlu0
  %v198 = vpop.trf.xlu0
  %v199 = vpop.trf.xlu0
  %v200 = vpop.trf.xlu0
  %v201 = vpop.trf.xlu0
  %v202 = vpop.trf.xlu0
  %v203 = vpop.trf.xlu0
  %v204 = vpop.trf.xlu0
  %v205 = vpop.trf.xlu0
  %v206 = vpop.trf.xlu0
  %v207 = vpop.trf.xlu0
  %v208 = vpop.trf.xlu0
  %v209 = vpop.trf.xlu0
  %v210 = vpop.trf.xlu0
  %v211 = vpop.trf.xlu0
  %v212 = vpop.trf.xlu0
  %213 = vxpose.xlu0.b32.start [1/16] %v127, 128
  %214 = vxpose.xlu0.b32.cont [2/16] %v130, 128
  %215 = vxpose.xlu0.b32.cont [3/16] 0.0, 128
  %216 = vxpose.xlu0.b32.cont [4/16] 0.0, 128
  %217 = vxpose.xlu0.b32.cont [5/16] 0.0, 128
  %218 = vxpose.xlu0.b32.cont [6/16] 0.0, 128
  %219 = vxpose.xlu0.b32.cont [7/16] 0.0, 128
  %220 = vxpose.xlu0.b32.cont [8/16] 0.0, 128
  %221 = vxpose.xlu0.b32.cont [9/16] 0.0, 128
  %222 = vxpose.xlu0.b32.cont [10/16] 0.0, 128
  %223 = vxpose.xlu0.b32.cont [11/16] 0.0, 128
  %224 = vxpose.xlu0.b32.cont [12/16] 0.0, 128
  %225 = vxpose.xlu0.b32.cont [13/16] 0.0, 128
  %226 = vxpose.xlu0.b32.cont [14/16] 0.0, 128
  %227 = vxpose.xlu0.b32.cont [15/16] 0.0, 128
  %228 = vxpose.xlu0.b32.end [16/16] 0.0, 128
  %v229 = vpop.trf.xlu0
  %v230 = vpop.trf.xlu0
  %v231 = vpop.trf.xlu0
  %v232 = vpop.trf.xlu0
  %v233 = vpop.trf.xlu0
  %v234 = vpop.trf.xlu0
  %v235 = vpop.trf.xlu0
  %v236 = vpop.trf.xlu0
  %v237 = vpop.trf.xlu0
  %v238 = vpop.trf.xlu0
  %v239 = vpop.trf.xlu0
  %v240 = vpop.trf.xlu0
  %v241 = vpop.trf.xlu0
  %v242 = vpop.trf.xlu0
  %v243 = vpop.trf.xlu0
  %v244 = vpop.trf.xlu0
  %245 = vxpose.xlu0.b32.start [1/16] %v135, 128
  %246 = vxpose.xlu0.b32.cont [2/16] %v138, 128
  %247 = vxpose.xlu0.b32.cont [3/16] 0.0, 128
  %248 = vxpose.xlu0.b32.cont [4/16] 0.0, 128
  %249 = vxpose.xlu0.b32.cont [5/16] 0.0, 128
  %250 = vxpose.xlu0.b32.cont [6/16] 0.0, 128
  %251 = vxpose.xlu0.b32.cont [7/16] 0.0, 128
  %252 = vxpose.xlu0.b32.cont [8/16] 0.0, 128
  %253 = vxpose.xlu0.b32.cont [9/16] 0.0, 128
  %254 = vxpose.xlu0.b32.cont [10/16] 0.0, 128
  %255 = vxpose.xlu0.b32.cont [11/16] 0.0, 128
  %256 = vxpose.xlu0.b32.cont [12/16] 0.0, 128
  %257 = vxpose.xlu0.b32.cont [13/16] 0.0, 128
  %258 = vxpose.xlu0.b32.cont [14/16] 0.0, 128
  %259 = vxpose.xlu0.b32.cont [15/16] 0.0, 128
  %260 = vxpose.xlu0.b32.end [16/16] 0.0, 128
  %v261 = vpop.trf.xlu0
  %v262 = vpop.trf.xlu0
  %v263 = vpop.trf.xlu0
  %v264 = vpop.trf.xlu0
  %v265 = vpop.trf.xlu0
  %v266 = vpop.trf.xlu0
  %v267 = vpop.trf.xlu0
  %v268 = vpop.trf.xlu0
  %v269 = vpop.trf.xlu0
  %v270 = vpop.trf.xlu0
  %v271 = vpop.trf.xlu0
  %v272 = vpop.trf.xlu0
  %v273 = vpop.trf.xlu0
  %v274 = vpop.trf.xlu0
  %v275 = vpop.trf.xlu0
  %v276 = vpop.trf.xlu0
  %277 = vxpose.xlu0.b32.start [1/16] %v143, 128
  %278 = vxpose.xlu0.b32.cont [2/16] %v146, 128
  %279 = vxpose.xlu0.b32.cont [3/16] 0.0, 128
  %280 = vxpose.xlu0.b32.cont [4/16] 0.0, 128
  %281 = vxpose.xlu0.b32.cont [5/16] 0.0, 128
  %282 = vxpose.xlu0.b32.cont [6/16] 0.0, 128
  %283 = vxpose.xlu0.b32.cont [7/16] 0.0, 128
  %284 = vxpose.xlu0.b32.cont [8/16] 0.0, 128
  %285 = vxpose.xlu0.b32.cont [9/16] 0.0, 128
  %286 = vxpose.xlu0.b32.cont [10/16] 0.0, 128
  %287 = vxpose.xlu0.b32.cont [11/16] 0.0, 128
  %288 = vxpose.xlu0.b32.cont [12/16] 0.0, 128
  %289 = vxpose.xlu0.b32.cont [13/16] 0.0, 128
  %290 = vxpose.xlu0.b32.cont [14/16] 0.0, 128
  %291 = vxpose.xlu0.b32.cont [15/16] 0.0, 128
  %292 = vxpose.xlu0.b32.end [16/16] 0.0, 128
  %v293 = vpop.trf.xlu0
  %v294 = vpop.trf.xlu0
  %v295 = vpop.trf.xlu0
  %v296 = vpop.trf.xlu0
  %v297 = vpop.trf.xlu0
  %v298 = vpop.trf.xlu0
  %v299 = vpop.trf.xlu0
  %v300 = vpop.trf.xlu0
  %v301 = vpop.trf.xlu0
  %v302 = vpop.trf.xlu0
  %v303 = vpop.trf.xlu0
  %v304 = vpop.trf.xlu0
  %v305 = vpop.trf.xlu0
  %v306 = vpop.trf.xlu0
  %v307 = vpop.trf.xlu0
  %v308 = vpop.trf.xlu0
  %309 = vxpose.xlu0.b32.start [1/16] %v151, 128
  %310 = vxpose.xlu0.b32.cont [2/16] %v154, 128
  %311 = vxpose.xlu0.b32.cont [3/16] 0.0, 128
  %312 = vxpose.xlu0.b32.cont [4/16] 0.0, 128
  %313 = vxpose.xlu0.b32.cont [5/16] 0.0, 128
  %314 = vxpose.xlu0.b32.cont [6/16] 0.0, 128
  %315 = vxpose.xlu0.b32.cont [7/16] 0.0, 128
  %316 = vxpose.xlu0.b32.cont [8/16] 0.0, 128
  %317 = vxpose.xlu0.b32.cont [9/16] 0.0, 128
  %318 = vxpose.xlu0.b32.cont [10/16] 0.0, 128
  %319 = vxpose.xlu0.b32.cont [11/16] 0.0, 128
  %320 = vxpose.xlu0.b32.cont [12/16] 0.0, 128
  %321 = vxpose.xlu0.b32.cont [13/16] 0.0, 128
  %322 = vxpose.xlu0.b32.cont [14/16] 0.0, 128
  %323 = vxpose.xlu0.b32.cont [15/16] 0.0, 128
  %324 = vxpose.xlu0.b32.end [16/16] 0.0, 128
  %v325 = vpop.trf.xlu0
  %v326 = vpop.trf.xlu0
  %v327 = vpop.trf.xlu0
  %v328 = vpop.trf.xlu0
  %v329 = vpop.trf.xlu0
  %v330 = vpop.trf.xlu0
  %v331 = vpop.trf.xlu0
  %v332 = vpop.trf.xlu0
  %v333 = vpop.trf.xlu0
  %v334 = vpop.trf.xlu0
  %v335 = vpop.trf.xlu0
  %v336 = vpop.trf.xlu0
  %v337 = vpop.trf.xlu0
  %v338 = vpop.trf.xlu0
  %v339 = vpop.trf.xlu0
  %v340 = vpop.trf.xlu0
  %341 = vxpose.xlu0.b32.start [1/16] %v159, 128
  %342 = vxpose.xlu0.b32.cont [2/16] %v162, 128
  %343 = vxpose.xlu0.b32.cont [3/16] 0.0, 128
  %344 = vxpose.xlu0.b32.cont [4/16] 0.0, 128
  %345 = vxpose.xlu0.b32.cont [5/16] 0.0, 128
  %346 = vxpose.xlu0.b32.cont [6/16] 0.0, 128
  %347 = vxpose.xlu0.b32.cont [7/16] 0.0, 128
  %348 = vxpose.xlu0.b32.cont [8/16] 0.0, 128
  %349 = vxpose.xlu0.b32.cont [9/16] 0.0, 128
  %350 = vxpose.xlu0.b32.cont [10/16] 0.0, 128
  %351 = vxpose.xlu0.b32.cont [11/16] 0.0, 128
  %352 = vxpose.xlu0.b32.cont [12/16] 0.0, 128
  %353 = vxpose.xlu0.b32.cont [13/16] 0.0, 128
  %354 = vxpose.xlu0.b32.cont [14/16] 0.0, 128
  %355 = vxpose.xlu0.b32.cont [15/16] 0.0, 128
  %356 = vxpose.xlu0.b32.end [16/16] 0.0, 128
  %v357 = vpop.trf.xlu0
  %v358 = vpop.trf.xlu0
  %v359 = vpop.trf.xlu0
  %v360 = vpop.trf.xlu0
  %v361 = vpop.trf.xlu0
  %v362 = vpop.trf.xlu0
  %v363 = vpop.trf.xlu0
  %v364 = vpop.trf.xlu0
  %v365 = vpop.trf.xlu0
  %v366 = vpop.trf.xlu0
  %v367 = vpop.trf.xlu0
  %v368 = vpop.trf.xlu0
  %v369 = vpop.trf.xlu0
  %v370 = vpop.trf.xlu0
  %v371 = vpop.trf.xlu0
  %v372 = vpop.trf.xlu0
  %373 = vxpose.xlu0.b32.start [1/16] %v167, 128
  %374 = vxpose.xlu0.b32.cont [2/16] %v170, 128
  %375 = vxpose.xlu0.b32.cont [3/16] 0.0, 128
  %376 = vxpose.xlu0.b32.cont [4/16] 0.0, 128
  %377 = vxpose.xlu0.b32.cont [5/16] 0.0, 128
  %378 = vxpose.xlu0.b32.cont [6/16] 0.0, 128
  %379 = vxpose.xlu0.b32.cont [7/16] 0.0, 128
  %380 = vxpose.xlu0.b32.cont [8/16] 0.0, 128
  %381 = vxpose.xlu0.b32.cont [9/16] 0.0, 128
  %382 = vxpose.xlu0.b32.cont [10/16] 0.0, 128
  %383 = vxpose.xlu0.b32.cont [11/16] 0.0, 128
  %384 = vxpose.xlu0.b32.cont [12/16] 0.0, 128
  %385 = vxpose.xlu0.b32.cont [13/16] 0.0, 128
  %386 = vxpose.xlu0.b32.cont [14/16] 0.0, 128
  %387 = vxpose.xlu0.b32.cont [15/16] 0.0, 128
  %388 = vxpose.xlu0.b32.end [16/16] 0.0, 128
  %v389 = vpop.trf.xlu0
  %v390 = vpop.trf.xlu0
  %v391 = vpop.trf.xlu0
  %v392 = vpop.trf.xlu0
  %v393 = vpop.trf.xlu0
  %v394 = vpop.trf.xlu0
  %v395 = vpop.trf.xlu0
  %v396 = vpop.trf.xlu0
  %v397 = vpop.trf.xlu0
  %v398 = vpop.trf.xlu0
  %v399 = vpop.trf.xlu0
  %v400 = vpop.trf.xlu0
  %v401 = vpop.trf.xlu0
  %v402 = vpop.trf.xlu0
  %v403 = vpop.trf.xlu0
  %v404 = vpop.trf.xlu0
  %405 = vxpose.xlu0.b32.start [1/16] %v175, 128
  %406 = vxpose.xlu0.b32.cont [2/16] %v178, 128
  %407 = vxpose.xlu0.b32.cont [3/16] 0.0, 128
  %408 = vxpose.xlu0.b32.cont [4/16] 0.0, 128
  %409 = vxpose.xlu0.b32.cont [5/16] 0.0, 128
  %410 = vxpose.xlu0.b32.cont [6/16] 0.0, 128
  %411 = vxpose.xlu0.b32.cont [7/16] 0.0, 128
  %412 = vxpose.xlu0.b32.cont [8/16] 0.0, 128
  %413 = vxpose.xlu0.b32.cont [9/16] 0.0, 128
  %414 = vxpose.xlu0.b32.cont [10/16] 0.0, 128
  %415 = vxpose.xlu0.b32.cont [11/16] 0.0, 128
  %416 = vxpose.xlu0.b32.cont [12/16] 0.0, 128
  %417 = vxpose.xlu0.b32.cont [13/16] 0.0, 128
  %418 = vxpose.xlu0.b32.cont [14/16] 0.0, 128
  %419 = vxpose.xlu0.b32.cont [15/16] 0.0, 128
  %420 = vxpose.xlu0.b32.end [16/16] 0.0, 128
  %v421 = vpop.trf.xlu0
  %v422 = vpop.trf.xlu0
  %v423 = vpop.trf.xlu0
  %v424 = vpop.trf.xlu0
  %v425 = vpop.trf.xlu0
  %v426 = vpop.trf.xlu0
  %v427 = vpop.trf.xlu0
  %v428 = vpop.trf.xlu0
  %v429 = vpop.trf.xlu0
  %v430 = vpop.trf.xlu0
  %v431 = vpop.trf.xlu0
  %v432 = vpop.trf.xlu0
  %v433 = vpop.trf.xlu0
  %v434 = vpop.trf.xlu0
  %v435 = vpop.trf.xlu0
  %v436 = vpop.trf.xlu0
  %v437 = vpack.c.bf16 %v198, %v197
  %v438 = vpack.c.bf16 %v200, %v199
  %v439 = vpack.c.bf16 %v202, %v201
  %v440 = vpack.c.bf16 %v204, %v203
  %v441 = vpack.c.bf16 %v206, %v205
  %v442 = vpack.c.bf16 %v208, %v207
  %v443 = vpack.c.bf16 %v210, %v209
  %v444 = vpack.c.bf16 %v212, %v211
  %v445 = vpack.c.bf16 %v230, %v229
  %v446 = vpack.c.bf16 %v232, %v231
  %v447 = vpack.c.bf16 %v234, %v233
  %v448 = vpack.c.bf16 %v236, %v235
  %v449 = vpack.c.bf16 %v238, %v237
  %v450 = vpack.c.bf16 %v240, %v239
  %v451 = vpack.c.bf16 %v242, %v241
  %v452 = vpack.c.bf16 %v244, %v243
  %v453 = vpack.c.bf16 %v262, %v261
  %v454 = vpack.c.bf16 %v264, %v263
  %v455 = vpack.c.bf16 %v266, %v265
  %v456 = vpack.c.bf16 %v268, %v267
  %v457 = vpack.c.bf16 %v270, %v269
  %v458 = vpack.c.bf16 %v272, %v271
  %v459 = vpack.c.bf16 %v274, %v273
  %v460 = vpack.c.bf16 %v276, %v275
  %v461 = vpack.c.bf16 %v294, %v293
  %v462 = vpack.c.bf16 %v296, %v295
  %v463 = vpack.c.bf16 %v298, %v297
  %v464 = vpack.c.bf16 %v300, %v299
  %v465 = vpack.c.bf16 %v302, %v301
  %v466 = vpack.c.bf16 %v304, %v303
  %v467 = vpack.c.bf16 %v306, %v305
  %v468 = vpack.c.bf16 %v308, %v307
  %v469 = vpack.c.bf16 %v326, %v325
  %v470 = vpack.c.bf16 %v328, %v327
  %v471 = vpack.c.bf16 %v330, %v329
  %v472 = vpack.c.bf16 %v332, %v331
  %v473 = vpack.c.bf16 %v334, %v333
  %v474 = vpack.c.bf16 %v336, %v335
  %v475 = vpack.c.bf16 %v338, %v337
  %v476 = vpack.c.bf16 %v340, %v339
  %v477 = vpack.c.bf16 %v358, %v357
  %v478 = vpack.c.bf16 %v360, %v359
  %v479 = vpack.c.bf16 %v362, %v361
  %v480 = vpack.c.bf16 %v364, %v363
  %v481 = vpack.c.bf16 %v366, %v365
  %v482 = vpack.c.bf16 %v368, %v367
  %v483 = vpack.c.bf16 %v370, %v369
  %v484 = vpack.c.bf16 %v372, %v371
  %v485 = vpack.c.bf16 %v390, %v389
  %v486 = vpack.c.bf16 %v392, %v391
  %v487 = vpack.c.bf16 %v394, %v393
  %v488 = vpack.c.bf16 %v396, %v395
  %v489 = vpack.c.bf16 %v398, %v397
  %v490 = vpack.c.bf16 %v400, %v399
  %v491 = vpack.c.bf16 %v402, %v401
  %v492 = vpack.c.bf16 %v404, %v403
  %v493 = vpack.c.bf16 %v422, %v421
  %v494 = vpack.c.bf16 %v424, %v423
  %v495 = vpack.c.bf16 %v426, %v425
  %v496 = vpack.c.bf16 %v428, %v427
  %v497 = vpack.c.bf16 %v430, %v429
  %v498 = vpack.c.bf16 %v432, %v431
  %v499 = vpack.c.bf16 %v434, %v433
  %v500 = vpack.c.bf16 %v436, %v435
  %v501 = vld [vmem:[%s3] sm:$0xf]
  %v502 = vld [vmem:[%s3 + $0x4] sm:$0xf]
  %v505 = vunpack.c.l.b16 %v501
  %v506 = vunpack.c.l.b16 %v502
  %v507 = vpack.c.b16 %v506, %v505
  %v510 = vsel %vm59, %v437, 0
  %v513 = vsel %vm59, %v438, 0
  %v516 = vsel %vm59, %v439, 0
  %v519 = vsel %vm59, %v440, 0
  %v522 = vsel %vm59, %v441, 0
  %v525 = vsel %vm59, %v442, 0
  %v528 = vsel %vm59, %v443, 0
  %v531 = vsel %vm59, %v444, 0
  %v534 = vsel %vm59, %v445, 0
  %v537 = vsel %vm59, %v446, 0
  %v540 = vsel %vm59, %v447, 0
  %v543 = vsel %vm59, %v448, 0
  %v546 = vsel %vm59, %v449, 0
  %v549 = vsel %vm59, %v450, 0
  %v552 = vsel %vm59, %v451, 0
  %v555 = vsel %vm59, %v452, 0
  %v558 = vsel %vm59, %v453, 0
  %v561 = vsel %vm59, %v454, 0
  %v564 = vsel %vm59, %v455, 0
  %v567 = vsel %vm59, %v456, 0
  %v570 = vsel %vm59, %v457, 0
  %v573 = vsel %vm59, %v458, 0
  %v576 = vsel %vm59, %v459, 0
  %v579 = vsel %vm59, %v460, 0
  %v582 = vsel %vm59, %v461, 0
  %v585 = vsel %vm59, %v462, 0
  %v588 = vsel %vm59, %v463, 0
  %v591 = vsel %vm59, %v464, 0
  %v594 = vsel %vm59, %v465, 0
  %v597 = vsel %vm59, %v466, 0
  %v600 = vsel %vm59, %v467, 0
  %v603 = vsel %vm59, %v468, 0
  %v606 = vsel %vm59, %v469, 0
  %v609 = vsel %vm59, %v470, 0
  %v612 = vsel %vm59, %v471, 0
  %v615 = vsel %vm59, %v472, 0
  %v618 = vsel %vm59, %v473, 0
  %v621 = vsel %vm59, %v474, 0
  %v624 = vsel %vm59, %v475, 0
  %v627 = vsel %vm59, %v476, 0
  %v630 = vsel %vm59, %v477, 0
  %v633 = vsel %vm59, %v478, 0
  %v636 = vsel %vm59, %v479, 0
  %v639 = vsel %vm59, %v480, 0
  %v642 = vsel %vm59, %v481, 0
  %v645 = vsel %vm59, %v482, 0
  %v648 = vsel %vm59, %v483, 0
  %v651 = vsel %vm59, %v484, 0
  %v654 = vsel %vm59, %v485, 0
  %v657 = vsel %vm59, %v486, 0
  %v660 = vsel %vm59, %v487, 0
  %v663 = vsel %vm59, %v488, 0
  %v666 = vsel %vm59, %v489, 0
  %v669 = vsel %vm59, %v490, 0
  %v672 = vsel %vm59, %v491, 0
  %v675 = vsel %vm59, %v492, 0
  %v678 = vsel %vm59, %v493, 0
  %v681 = vsel %vm59, %v494, 0
  %v684 = vsel %vm59, %v495, 0
  %v687 = vsel %vm59, %v496, 0
  %v690 = vsel %vm59, %v497, 0
  %v693 = vsel %vm59, %v498, 0
  %v696 = vsel %vm59, %v499, 0
  %v699 = vsel %vm59, %v500, 0
  %701 = vmatprep.subr.bf16.mxu0 0
  %702 = vmatpush1.bf16.msra.mxu0 0
  %703 = vmatprep.subr.bf16.mxu0 0
  %704 = vmatpush1.bf16.msra.mxu0 0
  %705 = vmatprep.subr.bf16.mxu0 0
  %706 = vmatpush1.bf16.msra.mxu0 0
  %707 = vmatprep.subr.bf16.mxu0 0
  %708 = vmatpush1.bf16.msra.mxu0 0
  %709 = vmatprep.subr.bf16.mxu0 0
  %710 = vmatpush1.bf16.msra.mxu0 0
  %711 = vmatprep.subr.bf16.mxu0 0
  %712 = vmatpush1.bf16.msra.mxu0 0
  %713 = vmatprep.subr.bf16.mxu0 0
  %714 = vmatpush1.bf16.msra.mxu0 0
  %715 = vmatprep.subr.bf16.mxu0 0
  %716 = vmatpush1.bf16.msra.mxu0 %v507
  %717 = vmatprep.subr.bf16.mxu0 0
  %718 = vmatpush2.bf16.msra.mxu0 0
  %719 = vmatprep.subr.bf16.mxu0 0
  %720 = vmatpush2.bf16.msra.mxu0 0
  %721 = vmatprep.subr.bf16.mxu0 0
  %722 = vmatpush2.bf16.msra.mxu0 0
  %723 = vmatprep.subr.bf16.mxu0 0
  %724 = vmatpush2.bf16.msra.mxu0 0
  %725 = vmatprep.subr.bf16.mxu0 0
  %726 = vmatpush2.bf16.msra.mxu0 0
  %727 = vmatprep.subr.bf16.mxu0 0
  %728 = vmatpush2.bf16.msra.mxu0 0
  %729 = vmatprep.subr.bf16.mxu0 0
  %730 = vmatpush2.bf16.msra.mxu0 0
  %731 = vmatprep.subr.bf16.mxu0 0
  %732 = vmatpush2.bf16.msra.mxu0 0
  %733 = vmatprep.mubr.bf16.mxu0 0
  %734 = vmatmul.mubr.bf16.gmra.mxu0 %v510
  %v735 = vpop.f32.mrf.mxu0
  %v736 = vadd.f32 0.0, %v735
  %v737 = vpop.f32.mrf.mxu0
  %v738 = vpop.f32.mrf.mxu0
  %v739 = vadd.f32 0.0, %v738
  %v740 = vpop.f32.mrf.mxu0
  %741 = vmatprep.mubr.bf16.mxu0 0
  %742 = vmatmul.mubr.bf16.gmra.mxu0 %v513
  %v743 = vpop.f32.mrf.mxu0
  %v744 = vadd.f32 0.0, %v743
  %v745 = vpop.f32.mrf.mxu0
  %v746 = vpop.f32.mrf.mxu0
  %v747 = vadd.f32 0.0, %v746
  %v748 = vpop.f32.mrf.mxu0
  %749 = vmatprep.mubr.bf16.mxu0 0
  %750 = vmatmul.mubr.bf16.gmra.mxu0 %v516
  %v751 = vpop.f32.mrf.mxu0
  %v752 = vpop.f32.mrf.mxu0
  %v753 = vpop.f32.mrf.mxu0
  %v754 = vpop.f32.mrf.mxu0
  %755 = vmatprep.mubr.bf16.mxu0 0
  %756 = vmatmul.mubr.bf16.gmra.mxu0 %v519
  %v757 = vpop.f32.mrf.mxu0
  %v758 = vpop.f32.mrf.mxu0
  %v759 = vpop.f32.mrf.mxu0
  %v760 = vpop.f32.mrf.mxu0
  %761 = vmatprep.mubr.bf16.mxu0 0
  %762 = vmatmul.mubr.bf16.gmra.mxu0 %v522
  %v763 = vpop.f32.mrf.mxu0
  %v764 = vpop.f32.mrf.mxu0
  %v765 = vpop.f32.mrf.mxu0
  %v766 = vpop.f32.mrf.mxu0
  %767 = vmatprep.mubr.bf16.mxu0 0
  %768 = vmatmul.mubr.bf16.gmra.mxu0 %v525
  %v769 = vpop.f32.mrf.mxu0
  %v770 = vpop.f32.mrf.mxu0
  %v771 = vpop.f32.mrf.mxu0
  %v772 = vpop.f32.mrf.mxu0
  %773 = vmatprep.mubr.bf16.mxu0 0
  %774 = vmatmul.mubr.bf16.gmra.mxu0 %v528
  %v775 = vpop.f32.mrf.mxu0
  %v776 = vpop.f32.mrf.mxu0
  %v777 = vpop.f32.mrf.mxu0
  %v778 = vpop.f32.mrf.mxu0
  %779 = vmatprep.mubr.bf16.mxu0 0
  %780 = vmatmul.mubr.bf16.gmra.mxu0 %v531
  %v781 = vpop.f32.mrf.mxu0
  %v782 = vpop.f32.mrf.mxu0
  %v783 = vpop.f32.mrf.mxu0
  %v784 = vpop.f32.mrf.mxu0
  %785 = vmatprep.mubr.bf16.mxu0 0
  %786 = vmatmul.mubr.bf16.gmra.mxu0 %v534
  %v787 = vpop.f32.mrf.mxu0
  %v788 = vadd.f32 0.0, %v787
  %v789 = vpop.f32.mrf.mxu0
  %v790 = vpop.f32.mrf.mxu0
  %v791 = vadd.f32 0.0, %v790
  %v792 = vpop.f32.mrf.mxu0
  %793 = vmatprep.mubr.bf16.mxu0 0
  %794 = vmatmul.mubr.bf16.gmra.mxu0 %v537
  %v795 = vpop.f32.mrf.mxu0
  %v796 = vadd.f32 0.0, %v795
  %v797 = vpop.f32.mrf.mxu0
  %v798 = vpop.f32.mrf.mxu0
  %v799 = vadd.f32 0.0, %v798
  %v800 = vpop.f32.mrf.mxu0
  %801 = vmatprep.mubr.bf16.mxu0 0
  %802 = vmatmul.mubr.bf16.gmra.mxu0 %v540
  %v803 = vpop.f32.mrf.mxu0
  %v804 = vpop.f32.mrf.mxu0
  %v805 = vpop.f32.mrf.mxu0
  %v806 = vpop.f32.mrf.mxu0
  %807 = vmatprep.mubr.bf16.mxu0 0
  %808 = vmatmul.mubr.bf16.gmra.mxu0 %v543
  %v809 = vpop.f32.mrf.mxu0
  %v810 = vpop.f32.mrf.mxu0
  %v811 = vpop.f32.mrf.mxu0
  %v812 = vpop.f32.mrf.mxu0
  %813 = vmatprep.mubr.bf16.mxu0 0
  %814 = vmatmul.mubr.bf16.gmra.mxu0 %v546
  %v815 = vpop.f32.mrf.mxu0
  %v816 = vpop.f32.mrf.mxu0
  %v817 = vpop.f32.mrf.mxu0
  %v818 = vpop.f32.mrf.mxu0
  %819 = vmatprep.mubr.bf16.mxu0 0
  %820 = vmatmul.mubr.bf16.gmra.mxu0 %v549
  %v821 = vpop.f32.mrf.mxu0
  %v822 = vpop.f32.mrf.mxu0
  %v823 = vpop.f32.mrf.mxu0
  %v824 = vpop.f32.mrf.mxu0
  %825 = vmatprep.mubr.bf16.mxu0 0
  %826 = vmatmul.mubr.bf16.gmra.mxu0 %v552
  %v827 = vpop.f32.mrf.mxu0
  %v828 = vpop.f32.mrf.mxu0
  %v829 = vpop.f32.mrf.mxu0
  %v830 = vpop.f32.mrf.mxu0
  %831 = vmatprep.mubr.bf16.mxu0 0
  %832 = vmatmul.mubr.bf16.gmra.mxu0 %v555
  %v833 = vpop.f32.mrf.mxu0
  %v834 = vpop.f32.mrf.mxu0
  %v835 = vpop.f32.mrf.mxu0
  %v836 = vpop.f32.mrf.mxu0
  %837 = vmatprep.mubr.bf16.mxu0 0
  %838 = vmatmul.mubr.bf16.gmra.mxu0 %v558
  %v839 = vpop.f32.mrf.mxu0
  %v840 = vadd.f32 0.0, %v839
  %v841 = vpop.f32.mrf.mxu0
  %v842 = vpop.f32.mrf.mxu0
  %v843 = vadd.f32 0.0, %v842
  %v844 = vpop.f32.mrf.mxu0
  %845 = vmatprep.mubr.bf16.mxu0 0
  %846 = vmatmul.mubr.bf16.gmra.mxu0 %v561
  %v847 = vpop.f32.mrf.mxu0
  %v848 = vadd.f32 0.0, %v847
  %v849 = vpop.f32.mrf.mxu0
  %v850 = vpop.f32.mrf.mxu0
  %v851 = vadd.f32 0.0, %v850
  %v852 = vpop.f32.mrf.mxu0
  %853 = vmatprep.mubr.bf16.mxu0 0
  %854 = vmatmul.mubr.bf16.gmra.mxu0 %v564
  %v855 = vpop.f32.mrf.mxu0
  %v856 = vpop.f32.mrf.mxu0
  %v857 = vpop.f32.mrf.mxu0
  %v858 = vpop.f32.mrf.mxu0
  %859 = vmatprep.mubr.bf16.mxu0 0
  %860 = vmatmul.mubr.bf16.gmra.mxu0 %v567
  %v861 = vpop.f32.mrf.mxu0
  %v862 = vpop.f32.mrf.mxu0
  %v863 = vpop.f32.mrf.mxu0
  %v864 = vpop.f32.mrf.mxu0
  %865 = vmatprep.mubr.bf16.mxu0 0
  %866 = vmatmul.mubr.bf16.gmra.mxu0 %v570
  %v867 = vpop.f32.mrf.mxu0
  %v868 = vpop.f32.mrf.mxu0
  %v869 = vpop.f32.mrf.mxu0
  %v870 = vpop.f32.mrf.mxu0
  %871 = vmatprep.mubr.bf16.mxu0 0
  %872 = vmatmul.mubr.bf16.gmra.mxu0 %v573
  %v873 = vpop.f32.mrf.mxu0
  %v874 = vpop.f32.mrf.mxu0
  %v875 = vpop.f32.mrf.mxu0
  %v876 = vpop.f32.mrf.mxu0
  %877 = vmatprep.mubr.bf16.mxu0 0
  %878 = vmatmul.mubr.bf16.gmra.mxu0 %v576
  %v879 = vpop.f32.mrf.mxu0
  %v880 = vpop.f32.mrf.mxu0
  %v881 = vpop.f32.mrf.mxu0
  %v882 = vpop.f32.mrf.mxu0
  %883 = vmatprep.mubr.bf16.mxu0 0
  %884 = vmatmul.mubr.bf16.gmra.mxu0 %v579
  %v885 = vpop.f32.mrf.mxu0
  %v886 = vpop.f32.mrf.mxu0
  %v887 = vpop.f32.mrf.mxu0
  %v888 = vpop.f32.mrf.mxu0
  %889 = vmatprep.mubr.bf16.mxu0 0
  %890 = vmatmul.mubr.bf16.gmra.mxu0 %v582
  %v891 = vpop.f32.mrf.mxu0
  %v892 = vadd.f32 0.0, %v891
  %v893 = vpop.f32.mrf.mxu0
  %v894 = vpop.f32.mrf.mxu0
  %v895 = vadd.f32 0.0, %v894
  %v896 = vpop.f32.mrf.mxu0
  %897 = vmatprep.mubr.bf16.mxu0 0
  %898 = vmatmul.mubr.bf16.gmra.mxu0 %v585
  %v899 = vpop.f32.mrf.mxu0
  %v900 = vadd.f32 0.0, %v899
  %v901 = vpop.f32.mrf.mxu0
  %v902 = vpop.f32.mrf.mxu0
  %v903 = vadd.f32 0.0, %v902
  %v904 = vpop.f32.mrf.mxu0
  %905 = vmatprep.mubr.bf16.mxu0 0
  %906 = vmatmul.mubr.bf16.gmra.mxu0 %v588
  %v907 = vpop.f32.mrf.mxu0
  %v908 = vpop.f32.mrf.mxu0
  %v909 = vpop.f32.mrf.mxu0
  %v910 = vpop.f32.mrf.mxu0
  %911 = vmatprep.mubr.bf16.mxu0 0
  %912 = vmatmul.mubr.bf16.gmra.mxu0 %v591
  %v913 = vpop.f32.mrf.mxu0
  %v914 = vpop.f32.mrf.mxu0
  %v915 = vpop.f32.mrf.mxu0
  %v916 = vpop.f32.mrf.mxu0
  %917 = vmatprep.mubr.bf16.mxu0 0
  %918 = vmatmul.mubr.bf16.gmra.mxu0 %v594
  %v919 = vpop.f32.mrf.mxu0
  %v920 = vpop.f32.mrf.mxu0
  %v921 = vpop.f32.mrf.mxu0
  %v922 = vpop.f32.mrf.mxu0
  %923 = vmatprep.mubr.bf16.mxu0 0
  %924 = vmatmul.mubr.bf16.gmra.mxu0 %v597
  %v925 = vpop.f32.mrf.mxu0
  %v926 = vpop.f32.mrf.mxu0
  %v927 = vpop.f32.mrf.mxu0
  %v928 = vpop.f32.mrf.mxu0
  %929 = vmatprep.mubr.bf16.mxu0 0
  %930 = vmatmul.mubr.bf16.gmra.mxu0 %v600
  %v931 = vpop.f32.mrf.mxu0
  %v932 = vpop.f32.mrf.mxu0
  %v933 = vpop.f32.mrf.mxu0
  %v934 = vpop.f32.mrf.mxu0
  %935 = vmatprep.mubr.bf16.mxu0 0
  %936 = vmatmul.mubr.bf16.gmra.mxu0 %v603
  %v937 = vpop.f32.mrf.mxu0
  %v938 = vpop.f32.mrf.mxu0
  %v939 = vpop.f32.mrf.mxu0
  %v940 = vpop.f32.mrf.mxu0
  %941 = vmatprep.mubr.bf16.mxu0 0
  %942 = vmatmul.mubr.bf16.gmra.mxu0 %v606
  %v943 = vpop.f32.mrf.mxu0
  %v944 = vadd.f32 0.0, %v943
  %v945 = vpop.f32.mrf.mxu0
  %v946 = vpop.f32.mrf.mxu0
  %v947 = vadd.f32 0.0, %v946
  %v948 = vpop.f32.mrf.mxu0
  %949 = vmatprep.mubr.bf16.mxu0 0
  %950 = vmatmul.mubr.bf16.gmra.mxu0 %v609
  %v951 = vpop.f32.mrf.mxu0
  %v952 = vadd.f32 0.0, %v951
  %v953 = vpop.f32.mrf.mxu0
  %v954 = vpop.f32.mrf.mxu0
  %v955 = vadd.f32 0.0, %v954
  %v956 = vpop.f32.mrf.mxu0
  %957 = vmatprep.mubr.bf16.mxu0 0
  %958 = vmatmul.mubr.bf16.gmra.mxu0 %v612
  %v959 = vpop.f32.mrf.mxu0
  %v960 = vpop.f32.mrf.mxu0
  %v961 = vpop.f32.mrf.mxu0
  %v962 = vpop.f32.mrf.mxu0
  %963 = vmatprep.mubr.bf16.mxu0 0
  %964 = vmatmul.mubr.bf16.gmra.mxu0 %v615
  %v965 = vpop.f32.mrf.mxu0
  %v966 = vpop.f32.mrf.mxu0
  %v967 = vpop.f32.mrf.mxu0
  %v968 = vpop.f32.mrf.mxu0
  %969 = vmatprep.mubr.bf16.mxu0 0
  %970 = vmatmul.mubr.bf16.gmra.mxu0 %v618
  %v971 = vpop.f32.mrf.mxu0
  %v972 = vpop.f32.mrf.mxu0
  %v973 = vpop.f32.mrf.mxu0
  %v974 = vpop.f32.mrf.mxu0
  %975 = vmatprep.mubr.bf16.mxu0 0
  %976 = vmatmul.mubr.bf16.gmra.mxu0 %v621
  %v977 = vpop.f32.mrf.mxu0
  %v978 = vpop.f32.mrf.mxu0
  %v979 = vpop.f32.mrf.mxu0
  %v980 = vpop.f32.mrf.mxu0
  %981 = vmatprep.mubr.bf16.mxu0 0
  %982 = vmatmul.mubr.bf16.gmra.mxu0 %v624
  %v983 = vpop.f32.mrf.mxu0
  %v984 = vpop.f32.mrf.mxu0
  %v985 = vpop.f32.mrf.mxu0
  %v986 = vpop.f32.mrf.mxu0
  %987 = vmatprep.mubr.bf16.mxu0 0
  %988 = vmatmul.mubr.bf16.gmra.mxu0 %v627
  %v989 = vpop.f32.mrf.mxu0
  %v990 = vpop.f32.mrf.mxu0
  %v991 = vpop.f32.mrf.mxu0
  %v992 = vpop.f32.mrf.mxu0
  %993 = vmatprep.mubr.bf16.mxu0 0
  %994 = vmatmul.mubr.bf16.gmra.mxu0 %v630
  %v995 = vpop.f32.mrf.mxu0
  %v996 = vadd.f32 0.0, %v995
  %v997 = vpop.f32.mrf.mxu0
  %v998 = vpop.f32.mrf.mxu0
  %v999 = vadd.f32 0.0, %v998
  %v1000 = vpop.f32.mrf.mxu0
  %1001 = vmatprep.mubr.bf16.mxu0 0
  %1002 = vmatmul.mubr.bf16.gmra.mxu0 %v633
  %v1003 = vpop.f32.mrf.mxu0
  %v1004 = vadd.f32 0.0, %v1003
  %v1005 = vpop.f32.mrf.mxu0
  %v1006 = vpop.f32.mrf.mxu0
  %v1007 = vadd.f32 0.0, %v1006
  %v1008 = vpop.f32.mrf.mxu0
  %1009 = vmatprep.mubr.bf16.mxu0 0
  %1010 = vmatmul.mubr.bf16.gmra.mxu0 %v636
  %v1011 = vpop.f32.mrf.mxu0
  %v1012 = vpop.f32.mrf.mxu0
  %v1013 = vpop.f32.mrf.mxu0
  %v1014 = vpop.f32.mrf.mxu0
  %1015 = vmatprep.mubr.bf16.mxu0 0
  %1016 = vmatmul.mubr.bf16.gmra.mxu0 %v639
  %v1017 = vpop.f32.mrf.mxu0
  %v1018 = vpop.f32.mrf.mxu0
  %v1019 = vpop.f32.mrf.mxu0
  %v1020 = vpop.f32.mrf.mxu0
  %1021 = vmatprep.mubr.bf16.mxu0 0
  %1022 = vmatmul.mubr.bf16.gmra.mxu0 %v642
  %v1023 = vpop.f32.mrf.mxu0
  %v1024 = vpop.f32.mrf.mxu0
  %v1025 = vpop.f32.mrf.mxu0
  %v1026 = vpop.f32.mrf.mxu0
  %1027 = vmatprep.mubr.bf16.mxu0 0
  %1028 = vmatmul.mubr.bf16.gmra.mxu0 %v645
  %v1029 = vpop.f32.mrf.mxu0
  %v1030 = vpop.f32.mrf.mxu0
  %v1031 = vpop.f32.mrf.mxu0
  %v1032 = vpop.f32.mrf.mxu0
  %1033 = vmatprep.mubr.bf16.mxu0 0
  %1034 = vmatmul.mubr.bf16.gmra.mxu0 %v648
  %v1035 = vpop.f32.mrf.mxu0
  %v1036 = vpop.f32.mrf.mxu0
  %v1037 = vpop.f32.mrf.mxu0
  %v1038 = vpop.f32.mrf.mxu0
  %1039 = vmatprep.mubr.bf16.mxu0 0
  %1040 = vmatmul.mubr.bf16.gmra.mxu0 %v651
  %v1041 = vpop.f32.mrf.mxu0
  %v1042 = vpop.f32.mrf.mxu0
  %v1043 = vpop.f32.mrf.mxu0
  %v1044 = vpop.f32.mrf.mxu0
  %1045 = vmatprep.mubr.bf16.mxu0 0
  %1046 = vmatmul.mubr.bf16.gmra.mxu0 %v654
  %v1047 = vpop.f32.mrf.mxu0
  %v1048 = vadd.f32 0.0, %v1047
  %v1049 = vpop.f32.mrf.mxu0
  %v1050 = vpop.f32.mrf.mxu0
  %v1051 = vadd.f32 0.0, %v1050
  %v1052 = vpop.f32.mrf.mxu0
  %1053 = vmatprep.mubr.bf16.mxu0 0
  %1054 = vmatmul.mubr.bf16.gmra.mxu0 %v657
  %v1055 = vpop.f32.mrf.mxu0
  %v1056 = vadd.f32 0.0, %v1055
  %v1057 = vpop.f32.mrf.mxu0
  %v1058 = vpop.f32.mrf.mxu0
  %v1059 = vadd.f32 0.0, %v1058
  %v1060 = vpop.f32.mrf.mxu0
  %1061 = vmatprep.mubr.bf16.mxu0 0
  %1062 = vmatmul.mubr.bf16.gmra.mxu0 %v660
  %v1063 = vpop.f32.mrf.mxu0
  %v1064 = vpop.f32.mrf.mxu0
  %v1065 = vpop.f32.mrf.mxu0
  %v1066 = vpop.f32.mrf.mxu0
  %1067 = vmatprep.mubr.bf16.mxu0 0
  %1068 = vmatmul.mubr.bf16.gmra.mxu0 %v663
  %v1069 = vpop.f32.mrf.mxu0
  %v1070 = vpop.f32.mrf.mxu0
  %v1071 = vpop.f32.mrf.mxu0
  %v1072 = vpop.f32.mrf.mxu0
  %1073 = vmatprep.mubr.bf16.mxu0 0
  %1074 = vmatmul.mubr.bf16.gmra.mxu0 %v666
  %v1075 = vpop.f32.mrf.mxu0
  %v1076 = vpop.f32.mrf.mxu0
  %v1077 = vpop.f32.mrf.mxu0
  %v1078 = vpop.f32.mrf.mxu0
  %1079 = vmatprep.mubr.bf16.mxu0 0
  %1080 = vmatmul.mubr.bf16.gmra.mxu0 %v669
  %v1081 = vpop.f32.mrf.mxu0
  %v1082 = vpop.f32.mrf.mxu0
  %v1083 = vpop.f32.mrf.mxu0
  %v1084 = vpop.f32.mrf.mxu0
  %1085 = vmatprep.mubr.bf16.mxu0 0
  %1086 = vmatmul.mubr.bf16.gmra.mxu0 %v672
  %v1087 = vpop.f32.mrf.mxu0
  %v1088 = vpop.f32.mrf.mxu0
  %v1089 = vpop.f32.mrf.mxu0
  %v1090 = vpop.f32.mrf.mxu0
  %1091 = vmatprep.mubr.bf16.mxu0 0
  %1092 = vmatmul.mubr.bf16.gmra.mxu0 %v675
  %v1093 = vpop.f32.mrf.mxu0
  %v1094 = vpop.f32.mrf.mxu0
  %v1095 = vpop.f32.mrf.mxu0
  %v1096 = vpop.f32.mrf.mxu0
  %1097 = vmatprep.mubr.bf16.mxu0 0
  %1098 = vmatmul.mubr.bf16.gmra.mxu0 %v678
  %v1099 = vpop.f32.mrf.mxu0
  %v1100 = vadd.f32 0.0, %v1099
  %v1101 = vpop.f32.mrf.mxu0
  %v1102 = vpop.f32.mrf.mxu0
  %v1103 = vadd.f32 0.0, %v1102
  %v1104 = vpop.f32.mrf.mxu0
  %1105 = vmatprep.mubr.bf16.mxu0 0
  %1106 = vmatmul.mubr.bf16.gmra.mxu0 %v681
  %v1107 = vpop.f32.mrf.mxu0
  %v1108 = vadd.f32 0.0, %v1107
  %v1109 = vpop.f32.mrf.mxu0
  %v1110 = vpop.f32.mrf.mxu0
  %v1111 = vadd.f32 0.0, %v1110
  %v1112 = vpop.f32.mrf.mxu0
  %1113 = vmatprep.mubr.bf16.mxu0 0
  %1114 = vmatmul.mubr.bf16.gmra.mxu0 %v684
  %v1115 = vpop.f32.mrf.mxu0
  %v1116 = vpop.f32.mrf.mxu0
  %v1117 = vpop.f32.mrf.mxu0
  %v1118 = vpop.f32.mrf.mxu0
  %1119 = vmatprep.mubr.bf16.mxu0 0
  %1120 = vmatmul.mubr.bf16.gmra.mxu0 %v687
  %v1121 = vpop.f32.mrf.mxu0
  %v1122 = vpop.f32.mrf.mxu0
  %v1123 = vpop.f32.mrf.mxu0
  %v1124 = vpop.f32.mrf.mxu0
  %1125 = vmatprep.mubr.bf16.mxu0 0
  %1126 = vmatmul.mubr.bf16.gmra.mxu0 %v690
  %v1127 = vpop.f32.mrf.mxu0
  %v1128 = vpop.f32.mrf.mxu0
  %v1129 = vpop.f32.mrf.mxu0
  %v1130 = vpop.f32.mrf.mxu0
  %1131 = vmatprep.mubr.bf16.mxu0 0
  %1132 = vmatmul.mubr.bf16.gmra.mxu0 %v693
  %v1133 = vpop.f32.mrf.mxu0
  %v1134 = vpop.f32.mrf.mxu0
  %v1135 = vpop.f32.mrf.mxu0
  %v1136 = vpop.f32.mrf.mxu0
  %1137 = vmatprep.mubr.bf16.mxu0 0
  %1138 = vmatmul.mubr.bf16.gmra.mxu0 %v696
  %v1139 = vpop.f32.mrf.mxu0
  %v1140 = vpop.f32.mrf.mxu0
  %v1141 = vpop.f32.mrf.mxu0
  %v1142 = vpop.f32.mrf.mxu0
  %1143 = vmatprep.mubr.bf16.mxu0 0
  %1144 = vmatmul.mubr.bf16.gmra.mxu0 %v699
  %v1145 = vpop.f32.mrf.mxu0
  %v1146 = vpop.f32.mrf.mxu0
  %v1147 = vpop.f32.mrf.mxu0
  %v1148 = vpop.f32.mrf.mxu0
  %1149 = vdwg.mxu0
  %v1150 = vld [vmem:[%s4] sm:$0xf]
  %v1151 = vld [vmem:[%s4 + $0x4] sm:$0xf]
  %v1154 = vunpack.c.l.b16 %v1150
  %v1155 = vunpack.c.l.b16 %v1151
  %v1156 = vpack.c.b16 %v1155, %v1154
  %1158 = vmatprep.subr.bf16.mxu0 0
  %1159 = vmatpush1.bf16.msra.mxu0 0
  %1160 = vmatprep.subr.bf16.mxu0 0
  %1161 = vmatpush1.bf16.msra.mxu0 0
  %1162 = vmatprep.subr.bf16.mxu0 0
  %1163 = vmatpush1.bf16.msra.mxu0 0
  %1164 = vmatprep.subr.bf16.mxu0 0
  %1165 = vmatpush1.bf16.msra.mxu0 0
  %1166 = vmatprep.subr.bf16.mxu0 0
  %1167 = vmatpush1.bf16.msra.mxu0 0
  %1168 = vmatprep.subr.bf16.mxu0 0
  %1169 = vmatpush1.bf16.msra.mxu0 0
  %1170 = vmatprep.subr.bf16.mxu0 0
  %1171 = vmatpush1.bf16.msra.mxu0 0
  %1172 = vmatprep.subr.bf16.mxu0 0
  %1173 = vmatpush1.bf16.msra.mxu0 %v1156
  %1174 = vmatprep.subr.bf16.mxu0 0
  %1175 = vmatpush2.bf16.msra.mxu0 0
  %1176 = vmatprep.subr.bf16.mxu0 0
  %1177 = vmatpush2.bf16.msra.mxu0 0
  %1178 = vmatprep.subr.bf16.mxu0 0
  %1179 = vmatpush2.bf16.msra.mxu0 0
  %1180 = vmatprep.subr.bf16.mxu0 0
  %1181 = vmatpush2.bf16.msra.mxu0 0
  %1182 = vmatprep.subr.bf16.mxu0 0
  %1183 = vmatpush2.bf16.msra.mxu0 0
  %1184 = vmatprep.subr.bf16.mxu0 0
  %1185 = vmatpush2.bf16.msra.mxu0 0
  %1186 = vmatprep.subr.bf16.mxu0 0
  %1187 = vmatpush2.bf16.msra.mxu0 0
  %1188 = vmatprep.subr.bf16.mxu0 0
  %1189 = vmatpush2.bf16.msra.mxu0 0
  %1190 = vmatprep.mubr.bf16.mxu0 0
  %1191 = vmatmul.mubr.bf16.gmra.mxu0 %v510
  %v1192 = vpop.f32.mrf.mxu0
  %v1193 = vadd.f32 0.0, %v1192
  %v1194 = vpop.f32.mrf.mxu0
  %v1195 = vpop.f32.mrf.mxu0
  %v1196 = vadd.f32 0.0, %v1195
  %v1197 = vpop.f32.mrf.mxu0
  %1198 = vmatprep.mubr.bf16.mxu0 0
  %1199 = vmatmul.mubr.bf16.gmra.mxu0 %v513
  %v1200 = vpop.f32.mrf.mxu0
  %v1201 = vadd.f32 0.0, %v1200
  %v1202 = vpop.f32.mrf.mxu0
  %v1203 = vpop.f32.mrf.mxu0
  %v1204 = vadd.f32 0.0, %v1203
  %v1205 = vpop.f32.mrf.mxu0
  %1206 = vmatprep.mubr.bf16.mxu0 0
  %1207 = vmatmul.mubr.bf16.gmra.mxu0 %v516
  %v1208 = vpop.f32.mrf.mxu0
  %v1209 = vpop.f32.mrf.mxu0
  %v1210 = vpop.f32.mrf.mxu0
  %v1211 = vpop.f32.mrf.mxu0
  %1212 = vmatprep.mubr.bf16.mxu0 0
  %1213 = vmatmul.mubr.bf16.gmra.mxu0 %v519
  %v1214 = vpop.f32.mrf.mxu0
  %v1215 = vpop.f32.mrf.mxu0
  %v1216 = vpop.f32.mrf.mxu0
  %v1217 = vpop.f32.mrf.mxu0
  %1218 = vmatprep.mubr.bf16.mxu0 0
  %1219 = vmatmul.mubr.bf16.gmra.mxu0 %v522
  %v1220 = vpop.f32.mrf.mxu0
  %v1221 = vpop.f32.mrf.mxu0
  %v1222 = vpop.f32.mrf.mxu0
  %v1223 = vpop.f32.mrf.mxu0
  %1224 = vmatprep.mubr.bf16.mxu0 0
  %1225 = vmatmul.mubr.bf16.gmra.mxu0 %v525
  %v1226 = vpop.f32.mrf.mxu0
  %v1227 = vpop.f32.mrf.mxu0
  %v1228 = vpop.f32.mrf.mxu0
  %v1229 = vpop.f32.mrf.mxu0
  %1230 = vmatprep.mubr.bf16.mxu0 0
  %1231 = vmatmul.mubr.bf16.gmra.mxu0 %v528
  %v1232 = vpop.f32.mrf.mxu0
  %v1233 = vpop.f32.mrf.mxu0
  %v1234 = vpop.f32.mrf.mxu0
  %v1235 = vpop.f32.mrf.mxu0
  %1236 = vmatprep.mubr.bf16.mxu0 0
  %1237 = vmatmul.mubr.bf16.gmra.mxu0 %v531
  %v1238 = vpop.f32.mrf.mxu0
  %v1239 = vpop.f32.mrf.mxu0
  %v1240 = vpop.f32.mrf.mxu0
  %v1241 = vpop.f32.mrf.mxu0
  %1242 = vmatprep.mubr.bf16.mxu0 0
  %1243 = vmatmul.mubr.bf16.gmra.mxu0 %v534
  %v1244 = vpop.f32.mrf.mxu0
  %v1245 = vadd.f32 0.0, %v1244
  %v1246 = vpop.f32.mrf.mxu0
  %v1247 = vpop.f32.mrf.mxu0
  %v1248 = vadd.f32 0.0, %v1247
  %v1249 = vpop.f32.mrf.mxu0
  %1250 = vmatprep.mubr.bf16.mxu0 0
  %1251 = vmatmul.mubr.bf16.gmra.mxu0 %v537
  %v1252 = vpop.f32.mrf.mxu0
  %v1253 = vadd.f32 0.0, %v1252
  %v1254 = vpop.f32.mrf.mxu0
  %v1255 = vpop.f32.mrf.mxu0
  %v1256 = vadd.f32 0.0, %v1255
  %v1257 = vpop.f32.mrf.mxu0
  %1258 = vmatprep.mubr.bf16.mxu0 0
  %1259 = vmatmul.mubr.bf16.gmra.mxu0 %v540
  %v1260 = vpop.f32.mrf.mxu0
  %v1261 = vpop.f32.mrf.mxu0
  %v1262 = vpop.f32.mrf.mxu0
  %v1263 = vpop.f32.mrf.mxu0
  %1264 = vmatprep.mubr.bf16.mxu0 0
  %1265 = vmatmul.mubr.bf16.gmra.mxu0 %v543
  %v1266 = vpop.f32.mrf.mxu0
  %v1267 = vpop.f32.mrf.mxu0
  %v1268 = vpop.f32.mrf.mxu0
  %v1269 = vpop.f32.mrf.mxu0
  %1270 = vmatprep.mubr.bf16.mxu0 0
  %1271 = vmatmul.mubr.bf16.gmra.mxu0 %v546
  %v1272 = vpop.f32.mrf.mxu0
  %v1273 = vpop.f32.mrf.mxu0
  %v1274 = vpop.f32.mrf.mxu0
  %v1275 = vpop.f32.mrf.mxu0
  %1276 = vmatprep.mubr.bf16.mxu0 0
  %1277 = vmatmul.mubr.bf16.gmra.mxu0 %v549
  %v1278 = vpop.f32.mrf.mxu0
  %v1279 = vpop.f32.mrf.mxu0
  %v1280 = vpop.f32.mrf.mxu0
  %v1281 = vpop.f32.mrf.mxu0
  %1282 = vmatprep.mubr.bf16.mxu0 0
  %1283 = vmatmul.mubr.bf16.gmra.mxu0 %v552
  %v1284 = vpop.f32.mrf.mxu0
  %v1285 = vpop.f32.mrf.mxu0
  %v1286 = vpop.f32.mrf.mxu0
  %v1287 = vpop.f32.mrf.mxu0
  %1288 = vmatprep.mubr.bf16.mxu0 0
  %1289 = vmatmul.mubr.bf16.gmra.mxu0 %v555
  %v1290 = vpop.f32.mrf.mxu0
  %v1291 = vpop.f32.mrf.mxu0
  %v1292 = vpop.f32.mrf.mxu0
  %v1293 = vpop.f32.mrf.mxu0
  %1294 = vmatprep.mubr.bf16.mxu0 0
  %1295 = vmatmul.mubr.bf16.gmra.mxu0 %v558
  %v1296 = vpop.f32.mrf.mxu0
  %v1297 = vadd.f32 0.0, %v1296
  %v1298 = vpop.f32.mrf.mxu0
  %v1299 = vpop.f32.mrf.mxu0
  %v1300 = vadd.f32 0.0, %v1299
  %v1301 = vpop.f32.mrf.mxu0
  %1302 = vmatprep.mubr.bf16.mxu0 0
  %1303 = vmatmul.mubr.bf16.gmra.mxu0 %v561
  %v1304 = vpop.f32.mrf.mxu0
  %v1305 = vadd.f32 0.0, %v1304
  %v1306 = vpop.f32.mrf.mxu0
  %v1307 = vpop.f32.mrf.mxu0
  %v1308 = vadd.f32 0.0, %v1307
  %v1309 = vpop.f32.mrf.mxu0
  %1310 = vmatprep.mubr.bf16.mxu0 0
  %1311 = vmatmul.mubr.bf16.gmra.mxu0 %v564
  %v1312 = vpop.f32.mrf.mxu0
  %v1313 = vpop.f32.mrf.mxu0
  %v1314 = vpop.f32.mrf.mxu0
  %v1315 = vpop.f32.mrf.mxu0
  %1316 = vmatprep.mubr.bf16.mxu0 0
  %1317 = vmatmul.mubr.bf16.gmra.mxu0 %v567
  %v1318 = vpop.f32.mrf.mxu0
  %v1319 = vpop.f32.mrf.mxu0
  %v1320 = vpop.f32.mrf.mxu0
  %v1321 = vpop.f32.mrf.mxu0
  %1322 = vmatprep.mubr.bf16.mxu0 0
  %1323 = vmatmul.mubr.bf16.gmra.mxu0 %v570
  %v1324 = vpop.f32.mrf.mxu0
  %v1325 = vpop.f32.mrf.mxu0
  %v1326 = vpop.f32.mrf.mxu0
  %v1327 = vpop.f32.mrf.mxu0
  %1328 = vmatprep.mubr.bf16.mxu0 0
  %1329 = vmatmul.mubr.bf16.gmra.mxu0 %v573
  %v1330 = vpop.f32.mrf.mxu0
  %v1331 = vpop.f32.mrf.mxu0
  %v1332 = vpop.f32.mrf.mxu0
  %v1333 = vpop.f32.mrf.mxu0
  %1334 = vmatprep.mubr.bf16.mxu0 0
  %1335 = vmatmul.mubr.bf16.gmra.mxu0 %v576
  %v1336 = vpop.f32.mrf.mxu0
  %v1337 = vpop.f32.mrf.mxu0
  %v1338 = vpop.f32.mrf.mxu0
  %v1339 = vpop.f32.mrf.mxu0
  %1340 = vmatprep.mubr.bf16.mxu0 0
  %1341 = vmatmul.mubr.bf16.gmra.mxu0 %v579
  %v1342 = vpop.f32.mrf.mxu0
  %v1343 = vpop.f32.mrf.mxu0
  %v1344 = vpop.f32.mrf.mxu0
  %v1345 = vpop.f32.mrf.mxu0
  %1346 = vmatprep.mubr.bf16.mxu0 0
  %1347 = vmatmul.mubr.bf16.gmra.mxu0 %v582
  %v1348 = vpop.f32.mrf.mxu0
  %v1349 = vadd.f32 0.0, %v1348
  %v1350 = vpop.f32.mrf.mxu0
  %v1351 = vpop.f32.mrf.mxu0
  %v1352 = vadd.f32 0.0, %v1351
  %v1353 = vpop.f32.mrf.mxu0
  %1354 = vmatprep.mubr.bf16.mxu0 0
  %1355 = vmatmul.mubr.bf16.gmra.mxu0 %v585
  %v1356 = vpop.f32.mrf.mxu0
  %v1357 = vadd.f32 0.0, %v1356
  %v1358 = vpop.f32.mrf.mxu0
  %v1359 = vpop.f32.mrf.mxu0
  %v1360 = vadd.f32 0.0, %v1359
  %v1361 = vpop.f32.mrf.mxu0
  %1362 = vmatprep.mubr.bf16.mxu0 0
  %1363 = vmatmul.mubr.bf16.gmra.mxu0 %v588
  %v1364 = vpop.f32.mrf.mxu0
  %v1365 = vpop.f32.mrf.mxu0
  %v1366 = vpop.f32.mrf.mxu0
  %v1367 = vpop.f32.mrf.mxu0
  %1368 = vmatprep.mubr.bf16.mxu0 0
  %1369 = vmatmul.mubr.bf16.gmra.mxu0 %v591
  %v1370 = vpop.f32.mrf.mxu0
  %v1371 = vpop.f32.mrf.mxu0
  %v1372 = vpop.f32.mrf.mxu0
  %v1373 = vpop.f32.mrf.mxu0
  %1374 = vmatprep.mubr.bf16.mxu0 0
  %1375 = vmatmul.mubr.bf16.gmra.mxu0 %v594
  %v1376 = vpop.f32.mrf.mxu0
  %v1377 = vpop.f32.mrf.mxu0
  %v1378 = vpop.f32.mrf.mxu0
  %v1379 = vpop.f32.mrf.mxu0
  %1380 = vmatprep.mubr.bf16.mxu0 0
  %1381 = vmatmul.mubr.bf16.gmra.mxu0 %v597
  %v1382 = vpop.f32.mrf.mxu0
  %v1383 = vpop.f32.mrf.mxu0
  %v1384 = vpop.f32.mrf.mxu0
  %v1385 = vpop.f32.mrf.mxu0
  %1386 = vmatprep.mubr.bf16.mxu0 0
  %1387 = vmatmul.mubr.bf16.gmra.mxu0 %v600
  %v1388 = vpop.f32.mrf.mxu0
  %v1389 = vpop.f32.mrf.mxu0
  %v1390 = vpop.f32.mrf.mxu0
  %v1391 = vpop.f32.mrf.mxu0
  %1392 = vmatprep.mubr.bf16.mxu0 0
  %1393 = vmatmul.mubr.bf16.gmra.mxu0 %v603
  %v1394 = vpop.f32.mrf.mxu0
  %v1395 = vpop.f32.mrf.mxu0
  %v1396 = vpop.f32.mrf.mxu0
  %v1397 = vpop.f32.mrf.mxu0
  %1398 = vmatprep.mubr.bf16.mxu0 0
  %1399 = vmatmul.mubr.bf16.gmra.mxu0 %v606
  %v1400 = vpop.f32.mrf.mxu0
  %v1401 = vadd.f32 0.0, %v1400
  %v1402 = vpop.f32.mrf.mxu0
  %v1403 = vpop.f32.mrf.mxu0
  %v1404 = vadd.f32 0.0, %v1403
  %v1405 = vpop.f32.mrf.mxu0
  %1406 = vmatprep.mubr.bf16.mxu0 0
  %1407 = vmatmul.mubr.bf16.gmra.mxu0 %v609
  %v1408 = vpop.f32.mrf.mxu0
  %v1409 = vadd.f32 0.0, %v1408
  %v1410 = vpop.f32.mrf.mxu0
  %v1411 = vpop.f32.mrf.mxu0
  %v1412 = vadd.f32 0.0, %v1411
  %v1413 = vpop.f32.mrf.mxu0
  %1414 = vmatprep.mubr.bf16.mxu0 0
  %1415 = vmatmul.mubr.bf16.gmra.mxu0 %v612
  %v1416 = vpop.f32.mrf.mxu0
  %v1417 = vpop.f32.mrf.mxu0
  %v1418 = vpop.f32.mrf.mxu0
  %v1419 = vpop.f32.mrf.mxu0
  %1420 = vmatprep.mubr.bf16.mxu0 0
  %1421 = vmatmul.mubr.bf16.gmra.mxu0 %v615
  %v1422 = vpop.f32.mrf.mxu0
  %v1423 = vpop.f32.mrf.mxu0
  %v1424 = vpop.f32.mrf.mxu0
  %v1425 = vpop.f32.mrf.mxu0
  %1426 = vmatprep.mubr.bf16.mxu0 0
  %1427 = vmatmul.mubr.bf16.gmra.mxu0 %v618
  %v1428 = vpop.f32.mrf.mxu0
  %v1429 = vpop.f32.mrf.mxu0
  %v1430 = vpop.f32.mrf.mxu0
  %v1431 = vpop.f32.mrf.mxu0
  %1432 = vmatprep.mubr.bf16.mxu0 0
  %1433 = vmatmul.mubr.bf16.gmra.mxu0 %v621
  %v1434 = vpop.f32.mrf.mxu0
  %v1435 = vpop.f32.mrf.mxu0
  %v1436 = vpop.f32.mrf.mxu0
  %v1437 = vpop.f32.mrf.mxu0
  %1438 = vmatprep.mubr.bf16.mxu0 0
  %1439 = vmatmul.mubr.bf16.gmra.mxu0 %v624
  %v1440 = vpop.f32.mrf.mxu0
  %v1441 = vpop.f32.mrf.mxu0
  %v1442 = vpop.f32.mrf.mxu0
  %v1443 = vpop.f32.mrf.mxu0
  %1444 = vmatprep.mubr.bf16.mxu0 0
  %1445 = vmatmul.mubr.bf16.gmra.mxu0 %v627
  %v1446 = vpop.f32.mrf.mxu0
  %v1447 = vpop.f32.mrf.mxu0
  %v1448 = vpop.f32.mrf.mxu0
  %v1449 = vpop.f32.mrf.mxu0
  %1450 = vmatprep.mubr.bf16.mxu0 0
  %1451 = vmatmul.mubr.bf16.gmra.mxu0 %v630
  %v1452 = vpop.f32.mrf.mxu0
  %v1453 = vadd.f32 0.0, %v1452
  %v1454 = vpop.f32.mrf.mxu0
  %v1455 = vpop.f32.mrf.mxu0
  %v1456 = vadd.f32 0.0, %v1455
  %v1457 = vpop.f32.mrf.mxu0
  %1458 = vmatprep.mubr.bf16.mxu0 0
  %1459 = vmatmul.mubr.bf16.gmra.mxu0 %v633
  %v1460 = vpop.f32.mrf.mxu0
  %v1461 = vadd.f32 0.0, %v1460
  %v1462 = vpop.f32.mrf.mxu0
  %v1463 = vpop.f32.mrf.mxu0
  %v1464 = vadd.f32 0.0, %v1463
  %v1465 = vpop.f32.mrf.mxu0
  %1466 = vmatprep.mubr.bf16.mxu0 0
  %1467 = vmatmul.mubr.bf16.gmra.mxu0 %v636
  %v1468 = vpop.f32.mrf.mxu0
  %v1469 = vpop.f32.mrf.mxu0
  %v1470 = vpop.f32.mrf.mxu0
  %v1471 = vpop.f32.mrf.mxu0
  %1472 = vmatprep.mubr.bf16.mxu0 0
  %1473 = vmatmul.mubr.bf16.gmra.mxu0 %v639
  %v1474 = vpop.f32.mrf.mxu0
  %v1475 = vpop.f32.mrf.mxu0
  %v1476 = vpop.f32.mrf.mxu0
  %v1477 = vpop.f32.mrf.mxu0
  %1478 = vmatprep.mubr.bf16.mxu0 0
  %1479 = vmatmul.mubr.bf16.gmra.mxu0 %v642
  %v1480 = vpop.f32.mrf.mxu0
  %v1481 = vpop.f32.mrf.mxu0
  %v1482 = vpop.f32.mrf.mxu0
  %v1483 = vpop.f32.mrf.mxu0
  %1484 = vmatprep.mubr.bf16.mxu0 0
  %1485 = vmatmul.mubr.bf16.gmra.mxu0 %v645
  %v1486 = vpop.f32.mrf.mxu0
  %v1487 = vpop.f32.mrf.mxu0
  %v1488 = vpop.f32.mrf.mxu0
  %v1489 = vpop.f32.mrf.mxu0
  %1490 = vmatprep.mubr.bf16.mxu0 0
  %1491 = vmatmul.mubr.bf16.gmra.mxu0 %v648
  %v1492 = vpop.f32.mrf.mxu0
  %v1493 = vpop.f32.mrf.mxu0
  %v1494 = vpop.f32.mrf.mxu0
  %v1495 = vpop.f32.mrf.mxu0
  %1496 = vmatprep.mubr.bf16.mxu0 0
  %1497 = vmatmul.mubr.bf16.gmra.mxu0 %v651
  %v1498 = vpop.f32.mrf.mxu0
  %v1499 = vpop.f32.mrf.mxu0
  %v1500 = vpop.f32.mrf.mxu0
  %v1501 = vpop.f32.mrf.mxu0
  %1502 = vmatprep.mubr.bf16.mxu0 0
  %1503 = vmatmul.mubr.bf16.gmra.mxu0 %v654
  %v1504 = vpop.f32.mrf.mxu0
  %v1505 = vadd.f32 0.0, %v1504
  %v1506 = vpop.f32.mrf.mxu0
  %v1507 = vpop.f32.mrf.mxu0
  %v1508 = vadd.f32 0.0, %v1507
  %v1509 = vpop.f32.mrf.mxu0
  %1510 = vmatprep.mubr.bf16.mxu0 0
  %1511 = vmatmul.mubr.bf16.gmra.mxu0 %v657
  %v1512 = vpop.f32.mrf.mxu0
  %v1513 = vadd.f32 0.0, %v1512
  %v1514 = vpop.f32.mrf.mxu0
  %v1515 = vpop.f32.mrf.mxu0
  %v1516 = vadd.f32 0.0, %v1515
  %v1517 = vpop.f32.mrf.mxu0
  %1518 = vmatprep.mubr.bf16.mxu0 0
  %1519 = vmatmul.mubr.bf16.gmra.mxu0 %v660
  %v1520 = vpop.f32.mrf.mxu0
  %v1521 = vpop.f32.mrf.mxu0
  %v1522 = vpop.f32.mrf.mxu0
  %v1523 = vpop.f32.mrf.mxu0
  %1524 = vmatprep.mubr.bf16.mxu0 0
  %1525 = vmatmul.mubr.bf16.gmra.mxu0 %v663
  %v1526 = vpop.f32.mrf.mxu0
  %v1527 = vpop.f32.mrf.mxu0
  %v1528 = vpop.f32.mrf.mxu0
  %v1529 = vpop.f32.mrf.mxu0
  %1530 = vmatprep.mubr.bf16.mxu0 0
  %1531 = vmatmul.mubr.bf16.gmra.mxu0 %v666
  %v1532 = vpop.f32.mrf.mxu0
  %v1533 = vpop.f32.mrf.mxu0
  %v1534 = vpop.f32.mrf.mxu0
  %v1535 = vpop.f32.mrf.mxu0
  %1536 = vmatprep.mubr.bf16.mxu0 0
  %1537 = vmatmul.mubr.bf16.gmra.mxu0 %v669
  %v1538 = vpop.f32.mrf.mxu0
  %v1539 = vpop.f32.mrf.mxu0
  %v1540 = vpop.f32.mrf.mxu0
  %v1541 = vpop.f32.mrf.mxu0
  %1542 = vmatprep.mubr.bf16.mxu0 0
  %1543 = vmatmul.mubr.bf16.gmra.mxu0 %v672
  %v1544 = vpop.f32.mrf.mxu0
  %v1545 = vpop.f32.mrf.mxu0
  %v1546 = vpop.f32.mrf.mxu0
  %v1547 = vpop.f32.mrf.mxu0
  %1548 = vmatprep.mubr.bf16.mxu0 0
  %1549 = vmatmul.mubr.bf16.gmra.mxu0 %v675
  %v1550 = vpop.f32.mrf.mxu0
  %v1551 = vpop.f32.mrf.mxu0
  %v1552 = vpop.f32.mrf.mxu0
  %v1553 = vpop.f32.mrf.mxu0
  %1554 = vmatprep.mubr.bf16.mxu0 0
  %1555 = vmatmul.mubr.bf16.gmra.mxu0 %v678
  %v1556 = vpop.f32.mrf.mxu0
  %v1557 = vadd.f32 0.0, %v1556
  %v1558 = vpop.f32.mrf.mxu0
  %v1559 = vpop.f32.mrf.mxu0
  %v1560 = vadd.f32 0.0, %v1559
  %v1561 = vpop.f32.mrf.mxu0
  %1562 = vmatprep.mubr.bf16.mxu0 0
  %1563 = vmatmul.mubr.bf16.gmra.mxu0 %v681
  %v1564 = vpop.f32.mrf.mxu0
  %v1565 = vadd.f32 0.0, %v1564
  %v1566 = vpop.f32.mrf.mxu0
  %v1567 = vpop.f32.mrf.mxu0
  %v1568 = vadd.f32 0.0, %v1567
  %v1569 = vpop.f32.mrf.mxu0
  %1570 = vmatprep.mubr.bf16.mxu0 0
  %1571 = vmatmul.mubr.bf16.gmra.mxu0 %v684
  %v1572 = vpop.f32.mrf.mxu0
  %v1573 = vpop.f32.mrf.mxu0
  %v1574 = vpop.f32.mrf.mxu0
  %v1575 = vpop.f32.mrf.mxu0
  %1576 = vmatprep.mubr.bf16.mxu0 0
  %1577 = vmatmul.mubr.bf16.gmra.mxu0 %v687
  %v1578 = vpop.f32.mrf.mxu0
  %v1579 = vpop.f32.mrf.mxu0
  %v1580 = vpop.f32.mrf.mxu0
  %v1581 = vpop.f32.mrf.mxu0
  %1582 = vmatprep.mubr.bf16.mxu0 0
  %1583 = vmatmul.mubr.bf16.gmra.mxu0 %v690
  %v1584 = vpop.f32.mrf.mxu0
  %v1585 = vpop.f32.mrf.mxu0
  %v1586 = vpop.f32.mrf.mxu0
  %v1587 = vpop.f32.mrf.mxu0
  %1588 = vmatprep.mubr.bf16.mxu0 0
  %1589 = vmatmul.mubr.bf16.gmra.mxu0 %v693
  %v1590 = vpop.f32.mrf.mxu0
  %v1591 = vpop.f32.mrf.mxu0
  %v1592 = vpop.f32.mrf.mxu0
  %v1593 = vpop.f32.mrf.mxu0
  %1594 = vmatprep.mubr.bf16.mxu0 0
  %1595 = vmatmul.mubr.bf16.gmra.mxu0 %v696
  %v1596 = vpop.f32.mrf.mxu0
  %v1597 = vpop.f32.mrf.mxu0
  %v1598 = vpop.f32.mrf.mxu0
  %v1599 = vpop.f32.mrf.mxu0
  %1600 = vmatprep.mubr.bf16.mxu0 0
  %1601 = vmatmul.mubr.bf16.gmra.mxu0 %v699
  %v1602 = vpop.f32.mrf.mxu0
  %v1603 = vpop.f32.mrf.mxu0
  %v1604 = vpop.f32.mrf.mxu0
  %v1605 = vpop.f32.mrf.mxu0
  %1606 = vdwg.mxu0
  %v1607 = vsub.f32 %v736, %v1201
  %v1608 = vsub.f32 %v739, %v1204
  %v1609 = vsub.f32 %v788, %v1253
  %v1610 = vsub.f32 %v791, %v1256
  %v1611 = vsub.f32 %v840, %v1305
  %v1612 = vsub.f32 %v843, %v1308
  %v1613 = vsub.f32 %v892, %v1357
  %v1614 = vsub.f32 %v895, %v1360
  %v1615 = vsub.f32 %v944, %v1409
  %v1616 = vsub.f32 %v947, %v1412
  %v1617 = vsub.f32 %v996, %v1461
  %v1618 = vsub.f32 %v999, %v1464
  %v1619 = vsub.f32 %v1048, %v1513
  %v1620 = vsub.f32 %v1051, %v1516
  %v1621 = vsub.f32 %v1100, %v1565
  %v1622 = vsub.f32 %v1103, %v1568
  %v1623 = vadd.f32 %v1193, %v744
  %v1624 = vadd.f32 %v1196, %v747
  %v1625 = vadd.f32 %v1245, %v796
  %v1626 = vadd.f32 %v1248, %v799
  %v1627 = vadd.f32 %v1297, %v848
  %v1628 = vadd.f32 %v1300, %v851
  %v1629 = vadd.f32 %v1349, %v900
  %v1630 = vadd.f32 %v1352, %v903
  %v1631 = vadd.f32 %v1401, %v952
  %v1632 = vadd.f32 %v1404, %v955
  %v1633 = vadd.f32 %v1453, %v1004
  %v1634 = vadd.f32 %v1456, %v1007
  %v1635 = vadd.f32 %v1505, %v1056
  %v1636 = vadd.f32 %v1508, %v1059
  %v1637 = vadd.f32 %v1557, %v1108
  %v1638 = vadd.f32 %v1560, %v1111
  %v1639 = vmul.f32 %v1607, %v1607
  %v1640 = vmul.f32 %v1608, %v1608
  %v1641 = vmul.f32 %v1609, %v1609
  %v1642 = vmul.f32 %v1610, %v1610
  %v1643 = vmul.f32 %v1611, %v1611
  %v1644 = vmul.f32 %v1612, %v1612
  %v1645 = vmul.f32 %v1613, %v1613
  %v1646 = vmul.f32 %v1614, %v1614
  %v1647 = vmul.f32 %v1615, %v1615
  %v1648 = vmul.f32 %v1616, %v1616
  %v1649 = vmul.f32 %v1617, %v1617
  %v1650 = vmul.f32 %v1618, %v1618
  %v1651 = vmul.f32 %v1619, %v1619
  %v1652 = vmul.f32 %v1620, %v1620
  %v1653 = vmul.f32 %v1621, %v1621
  %v1654 = vmul.f32 %v1622, %v1622
  %v1655 = vmul.f32 %v1623, %v1623
  %v1656 = vmul.f32 %v1624, %v1624
  %v1657 = vmul.f32 %v1625, %v1625
  %v1658 = vmul.f32 %v1626, %v1626
  %v1659 = vmul.f32 %v1627, %v1627
  %v1660 = vmul.f32 %v1628, %v1628
  %v1661 = vmul.f32 %v1629, %v1629
  %v1662 = vmul.f32 %v1630, %v1630
  %v1663 = vmul.f32 %v1631, %v1631
  %v1664 = vmul.f32 %v1632, %v1632
  %v1665 = vmul.f32 %v1633, %v1633
  %v1666 = vmul.f32 %v1634, %v1634
  %v1667 = vmul.f32 %v1635, %v1635
  %v1668 = vmul.f32 %v1636, %v1636
  %v1669 = vmul.f32 %v1637, %v1637
  %v1670 = vmul.f32 %v1638, %v1638
  %v1671 = vadd.f32 %v1639, %v1655
  %v1672 = vadd.f32 %v1640, %v1656
  %v1673 = vadd.f32 %v1641, %v1657
  %v1674 = vadd.f32 %v1642, %v1658
  %v1675 = vadd.f32 %v1643, %v1659
  %v1676 = vadd.f32 %v1644, %v1660
  %v1677 = vadd.f32 %v1645, %v1661
  %v1678 = vadd.f32 %v1646, %v1662
  %v1679 = vadd.f32 %v1647, %v1663
  %v1680 = vadd.f32 %v1648, %v1664
  %v1681 = vadd.f32 %v1649, %v1665
  %v1682 = vadd.f32 %v1650, %v1666
  %v1683 = vadd.f32 %v1651, %v1667
  %v1684 = vadd.f32 %v1652, %v1668
  %v1685 = vadd.f32 %v1653, %v1669
  %v1686 = vadd.f32 %v1654, %v1670
  %v1687 = vrsqrt.pop %v1671
  %v1688 = vmul.f32 %v1671, %v1687
  %vm1689 = vcmp.eq.f32.partialorder %v1671, inf
  %v1690 = vsel %vm1689, %v1671, %v1688
  %vm1691 = vcmp.eq.f32.partialorder %v1671, 0.0
  %v1692 = vand.u32 %v1671, 2147483648
  %v1693 = vsel %vm1691, %v1692, %v1690
  %v1694 = vrsqrt.pop %v1672
  %v1695 = vmul.f32 %v1672, %v1694
  %vm1696 = vcmp.eq.f32.partialorder %v1672, inf
  %v1697 = vsel %vm1696, %v1672, %v1695
  %vm1698 = vcmp.eq.f32.partialorder %v1672, 0.0
  %v1699 = vand.u32 %v1672, 2147483648
  %v1700 = vsel %vm1698, %v1699, %v1697
  %v1701 = vrsqrt.pop %v1673
  %v1702 = vmul.f32 %v1673, %v1701
  %vm1703 = vcmp.eq.f32.partialorder %v1673, inf
  %v1704 = vsel %vm1703, %v1673, %v1702
  %vm1705 = vcmp.eq.f32.partialorder %v1673, 0.0
  %v1706 = vand.u32 %v1673, 2147483648
  %v1707 = vsel %vm1705, %v1706, %v1704
  %v1708 = vrsqrt.pop %v1674
  %v1709 = vmul.f32 %v1674, %v1708
  %vm1710 = vcmp.eq.f32.partialorder %v1674, inf
  %v1711 = vsel %vm1710, %v1674, %v1709
  %vm1712 = vcmp.eq.f32.partialorder %v1674, 0.0
  %v1713 = vand.u32 %v1674, 2147483648
  %v1714 = vsel %vm1712, %v1713, %v1711
  %v1715 = vrsqrt.pop %v1675
  %v1716 = vmul.f32 %v1675, %v1715
  %vm1717 = vcmp.eq.f32.partialorder %v1675, inf
  %v1718 = vsel %vm1717, %v1675, %v1716
  %vm1719 = vcmp.eq.f32.partialorder %v1675, 0.0
  %v1720 = vand.u32 %v1675, 2147483648
  %v1721 = vsel %vm1719, %v1720, %v1718
  %v1722 = vrsqrt.pop %v1676
  %v1723 = vmul.f32 %v1676, %v1722
  %vm1724 = vcmp.eq.f32.partialorder %v1676, inf
  %v1725 = vsel %vm1724, %v1676, %v1723
  %vm1726 = vcmp.eq.f32.partialorder %v1676, 0.0
  %v1727 = vand.u32 %v1676, 2147483648
  %v1728 = vsel %vm1726, %v1727, %v1725
  %v1729 = vrsqrt.pop %v1677
  %v1730 = vmul.f32 %v1677, %v1729
  %vm1731 = vcmp.eq.f32.partialorder %v1677, inf
  %v1732 = vsel %vm1731, %v1677, %v1730
  %vm1733 = vcmp.eq.f32.partialorder %v1677, 0.0
  %v1734 = vand.u32 %v1677, 2147483648
  %v1735 = vsel %vm1733, %v1734, %v1732
  %v1736 = vrsqrt.pop %v1678
  %v1737 = vmul.f32 %v1678, %v1736
  %vm1738 = vcmp.eq.f32.partialorder %v1678, inf
  %v1739 = vsel %vm1738, %v1678, %v1737
  %vm1740 = vcmp.eq.f32.partialorder %v1678, 0.0
  %v1741 = vand.u32 %v1678, 2147483648
  %v1742 = vsel %vm1740, %v1741, %v1739
  %v1743 = vrsqrt.pop %v1679
  %v1744 = vmul.f32 %v1679, %v1743
  %vm1745 = vcmp.eq.f32.partialorder %v1679, inf
  %v1746 = vsel %vm1745, %v1679, %v1744
  %vm1747 = vcmp.eq.f32.partialorder %v1679, 0.0
  %v1748 = vand.u32 %v1679, 2147483648
  %v1749 = vsel %vm1747, %v1748, %v1746
  %v1750 = vrsqrt.pop %v1680
  %v1751 = vmul.f32 %v1680, %v1750
  %vm1752 = vcmp.eq.f32.partialorder %v1680, inf
  %v1753 = vsel %vm1752, %v1680, %v1751
  %vm1754 = vcmp.eq.f32.partialorder %v1680, 0.0
  %v1755 = vand.u32 %v1680, 2147483648
  %v1756 = vsel %vm1754, %v1755, %v1753
  %v1757 = vrsqrt.pop %v1681
  %v1758 = vmul.f32 %v1681, %v1757
  %vm1759 = vcmp.eq.f32.partialorder %v1681, inf
  %v1760 = vsel %vm1759, %v1681, %v1758
  %vm1761 = vcmp.eq.f32.partialorder %v1681, 0.0
  %v1762 = vand.u32 %v1681, 2147483648
  %v1763 = vsel %vm1761, %v1762, %v1760
  %v1764 = vrsqrt.pop %v1682
  %v1765 = vmul.f32 %v1682, %v1764
  %vm1766 = vcmp.eq.f32.partialorder %v1682, inf
  %v1767 = vsel %vm1766, %v1682, %v1765
  %vm1768 = vcmp.eq.f32.partialorder %v1682, 0.0
  %v1769 = vand.u32 %v1682, 2147483648
  %v1770 = vsel %vm1768, %v1769, %v1767
  %v1771 = vrsqrt.pop %v1683
  %v1772 = vmul.f32 %v1683, %v1771
  %vm1773 = vcmp.eq.f32.partialorder %v1683, inf
  %v1774 = vsel %vm1773, %v1683, %v1772
  %vm1775 = vcmp.eq.f32.partialorder %v1683, 0.0
  %v1776 = vand.u32 %v1683, 2147483648
  %v1777 = vsel %vm1775, %v1776, %v1774
  %v1778 = vrsqrt.pop %v1684
  %v1779 = vmul.f32 %v1684, %v1778
  %vm1780 = vcmp.eq.f32.partialorder %v1684, inf
  %v1781 = vsel %vm1780, %v1684, %v1779
  %vm1782 = vcmp.eq.f32.partialorder %v1684, 0.0
  %v1783 = vand.u32 %v1684, 2147483648
  %v1784 = vsel %vm1782, %v1783, %v1781
  %v1785 = vrsqrt.pop %v1685
  %v1786 = vmul.f32 %v1685, %v1785
  %vm1787 = vcmp.eq.f32.partialorder %v1685, inf
  %v1788 = vsel %vm1787, %v1685, %v1786
  %vm1789 = vcmp.eq.f32.partialorder %v1685, 0.0
  %v1790 = vand.u32 %v1685, 2147483648
  %v1791 = vsel %vm1789, %v1790, %v1788
  %v1792 = vrsqrt.pop %v1686
  %v1793 = vmul.f32 %v1686, %v1792
  %vm1794 = vcmp.eq.f32.partialorder %v1686, inf
  %v1795 = vsel %vm1794, %v1686, %v1793
  %vm1796 = vcmp.eq.f32.partialorder %v1686, 0.0
  %v1797 = vand.u32 %v1686, 2147483648
  %v1798 = vsel %vm1796, %v1797, %v1795
  %v1799 = vsel %vm59, %v1693, 0.0
  %1800 = vadd.xlane.f32.xlu0 %v1799
  %v1801 = vpop.xlane.xlu0 %1800
  %vm1802 = vcmask 122880
  %v1803 = vsel %vm1802, %v1700, 0.0
  %1804 = vadd.xlane.f32.xlu0 %v1803
  %v1805 = vpop.xlane.xlu0 %1804
  %v1806 = vsel %vm59, %v1707, 0.0
  %1807 = vadd.xlane.f32.xlu0 %v1806
  %v1808 = vpop.xlane.xlu0 %1807
  %v1809 = vsel %vm1802, %v1714, 0.0
  %1810 = vadd.xlane.f32.xlu0 %v1809
  %v1811 = vpop.xlane.xlu0 %1810
  %v1812 = vsel %vm59, %v1721, 0.0
  %1813 = vadd.xlane.f32.xlu0 %v1812
  %v1814 = vpop.xlane.xlu0 %1813
  %v1815 = vsel %vm1802, %v1728, 0.0
  %1816 = vadd.xlane.f32.xlu0 %v1815
  %v1817 = vpop.xlane.xlu0 %1816
  %v1818 = vsel %vm59, %v1735, 0.0
  %1819 = vadd.xlane.f32.xlu0 %v1818
  %v1820 = vpop.xlane.xlu0 %1819
  %v1821 = vsel %vm1802, %v1742, 0.0
  %1822 = vadd.xlane.f32.xlu0 %v1821
  %v1823 = vpop.xlane.xlu0 %1822
  %v1824 = vsel %vm59, %v1749, 0.0
  %1825 = vadd.xlane.f32.xlu0 %v1824
  %v1826 = vpop.xlane.xlu0 %1825
  %v1827 = vsel %vm1802, %v1756, 0.0
  %1828 = vadd.xlane.f32.xlu0 %v1827
  %v1829 = vpop.xlane.xlu0 %1828
  %v1830 = vsel %vm59, %v1763, 0.0
  %1831 = vadd.xlane.f32.xlu0 %v1830
  %v1832 = vpop.xlane.xlu0 %1831
  %v1833 = vsel %vm1802, %v1770, 0.0
  %1834 = vadd.xlane.f32.xlu0 %v1833
  %v1835 = vpop.xlane.xlu0 %1834
  %v1836 = vsel %vm59, %v1777, 0.0
  %1837 = vadd.xlane.f32.xlu0 %v1836
  %v1838 = vpop.xlane.xlu0 %1837
  %v1839 = vsel %vm1802, %v1784, 0.0
  %1840 = vadd.xlane.f32.xlu0 %v1839
  %v1841 = vpop.xlane.xlu0 %1840
  %v1842 = vsel %vm59, %v1791, 0.0
  %1843 = vadd.xlane.f32.xlu0 %v1842
  %v1844 = vpop.xlane.xlu0 %1843
  %v1845 = vsel %vm1802, %v1798, 0.0
  %1846 = vadd.xlane.f32.xlu0 %v1845
  %v1847 = vpop.xlane.xlu0 %1846
  %v1864 = vlaneseq
  %v1865 = vand.u32 %v1864, 127
  %v1866 = vlaneseq
  %v1867 = vshrl.u32 %v1866, 7
  %v1868 = vsub.s32 %v1865, %v1867
  %v1869 = vrot.slane %v1801, %v1868
  %v1870 = vadd.s32 %v1865, 4294967288
  %v1871 = vlaneseq
  %v1872 = vshrl.u32 %v1871, 7
  %v1873 = vsub.s32 %v1870, %v1872
  %v1874 = vrot.slane %v1805, %v1873
  %vm1875 = vcmask 130112
  %v1876 = vsel %vm1875, %v1874, %v1869
  %v1877 = vlaneseq
  %v1878 = vshrl.u32 %v1877, 7
  %v1879 = vsub.s32 %v1865, %v1878
  %v1880 = vrot.slane %v1808, %v1879
  %v1881 = vlaneseq
  %v1882 = vshrl.u32 %v1881, 7
  %v1883 = vsub.s32 %v1870, %v1882
  %v1884 = vrot.slane %v1811, %v1883
  %v1885 = vsel %vm1875, %v1884, %v1880
  %v1886 = vlaneseq
  %v1887 = vshrl.u32 %v1886, 7
  %v1888 = vsub.s32 %v1865, %v1887
  %v1889 = vrot.slane %v1814, %v1888
  %v1890 = vlaneseq
  %v1891 = vshrl.u32 %v1890, 7
  %v1892 = vsub.s32 %v1870, %v1891
  %v1893 = vrot.slane %v1817, %v1892
  %v1894 = vsel %vm1875, %v1893, %v1889
  %v1895 = vlaneseq
  %v1896 = vshrl.u32 %v1895, 7
  %v1897 = vsub.s32 %v1865, %v1896
  %v1898 = vrot.slane %v1820, %v1897
  %v1899 = vlaneseq
  %v1900 = vshrl.u32 %v1899, 7
  %v1901 = vsub.s32 %v1870, %v1900
  %v1902 = vrot.slane %v1823, %v1901
  %v1903 = vsel %vm1875, %v1902, %v1898
  %v1904 = vlaneseq
  %v1905 = vshrl.u32 %v1904, 7
  %v1906 = vsub.s32 %v1865, %v1905
  %v1907 = vrot.slane %v1826, %v1906
  %v1908 = vlaneseq
  %v1909 = vshrl.u32 %v1908, 7
  %v1910 = vsub.s32 %v1870, %v1909
  %v1911 = vrot.slane %v1829, %v1910
  %v1912 = vsel %vm1875, %v1911, %v1907
  %v1913 = vlaneseq
  %v1914 = vshrl.u32 %v1913, 7
  %v1915 = vsub.s32 %v1865, %v1914
  %v1916 = vrot.slane %v1832, %v1915
  %v1917 = vlaneseq
  %v1918 = vshrl.u32 %v1917, 7
  %v1919 = vsub.s32 %v1870, %v1918
  %v1920 = vrot.slane %v1835, %v1919
  %v1921 = vsel %vm1875, %v1920, %v1916
  %v1922 = vlaneseq
  %v1923 = vshrl.u32 %v1922, 7
  %v1924 = vsub.s32 %v1865, %v1923
  %v1925 = vrot.slane %v1838, %v1924
  %v1926 = vlaneseq
  %v1927 = vshrl.u32 %v1926, 7
  %v1928 = vsub.s32 %v1870, %v1927
  %v1929 = vrot.slane %v1841, %v1928
  %v1930 = vsel %vm1875, %v1929, %v1925
  %v1931 = vlaneseq
  %v1932 = vshrl.u32 %v1931, 7
  %v1933 = vsub.s32 %v1865, %v1932
  %v1934 = vrot.slane %v1844, %v1933
  %v1935 = vlaneseq
  %v1936 = vshrl.u32 %v1935, 7
  %v1937 = vsub.s32 %v1870, %v1936
  %v1938 = vrot.slane %v1847, %v1937
  %v1939 = vsel %vm1875, %v1938, %v1934
  %vm1940 = vcmask 1041409
  %v1941 = vsel %vm1940, %v1885, %v1876
  %vm1942 = vcmask 1042434
  %v1943 = vsel %vm1942, %v1894, %v1941
  %vm1944 = vcmask 1043459
  %v1945 = vsel %vm1944, %v1903, %v1943
  %v1946 = vsel %vm1940, %v1921, %v1912
  %v1947 = vsel %vm1942, %v1930, %v1946
  %v1948 = vsel %vm1944, %v1939, %v1947
  %vm1951 = vcmask 68608
  %v1952 = vsel %vm1951, %v1945, 0.0
  %1953 = vadd.xlane.f32.xlu0 %v1952
  %v1954 = vpop.xlane.xlu0 %1953
  %v1955 = vsel %vm1951, %v1948, 0.0
  %1956 = vadd.xlane.f32.xlu0 %v1955
  %v1957 = vpop.xlane.xlu0 %1956
  %v1958 = vmul.f32 %v1954, 0.0069444445
  %v1959 = vmul.f32 %v1957, 0.0069444445
  %v1960 = vld [vmem:[%s5] sm:$0xf]
  %v1963 = vlaneseq
  %v1964 = vshrl.u32 %v1963, 7
  %v1965 = vsub.s32 %v1865, %v1964
  %v1966 = vrot.slane %v1958, %v1965
  %v1967 = vlaneseq
  %v1968 = vshrl.u32 %v1967, 7
  %v1969 = vsub.s32 %v1865, %v1968
  %v1970 = vrot.slane %v1959, %v1969
  %v1971 = vsel %vm1940, %v1970, %v1966
  %vm1972 = vcmask 31744
  %v1973 = vsel %vm1972, %v1971, 0
  %vm1975 = vcmask 1043456
  %v1977 = vsel %vm1975, %v1960, 0
  %1979 = vmatprep.subr.mxu0 0.0
  %1980 = vmatpush1.msra.mxu0 0.0
  %1981 = vmatprep.subr.mxu0 0.0
  %1982 = vmatpush1.msra.mxu0 0.0
  %1983 = vmatprep.subr.mxu0 0.0
  %1984 = vmatpush1.msra.mxu0 0.0
  %1985 = vmatprep.subr.mxu0 0.0
  %1986 = vmatpush1.msra.mxu0 0.0
  %1987 = vmatprep.subr.mxu0 0.0
  %1988 = vmatpush1.msra.mxu0 0.0
  %1989 = vmatprep.subr.mxu0 0.0
  %1990 = vmatpush1.msra.mxu0 0.0
  %1991 = vmatprep.subr.mxu0 0.0
  %1992 = vmatpush1.msra.mxu0 0.0
  %1993 = vmatprep.subr.mxu0 0.0
  %1994 = vmatpush1.msra.mxu0 0.0
  %1995 = vmatprep.subr.mxu0 0.0
  %1996 = vmatpush1.msra.mxu0 0.0
  %1997 = vmatprep.subr.mxu0 0.0
  %1998 = vmatpush1.msra.mxu0 0.0
  %1999 = vmatprep.subr.mxu0 0.0
  %2000 = vmatpush1.msra.mxu0 0.0
  %2001 = vmatprep.subr.mxu0 0.0
  %2002 = vmatpush1.msra.mxu0 0.0
  %2003 = vmatprep.subr.mxu0 0.0
  %2004 = vmatpush1.msra.mxu0 0.0
  %2005 = vmatprep.subr.mxu0 0.0
  %2006 = vmatpush1.msra.mxu0 0.0
  %2007 = vmatprep.subr.mxu0 0.0
  %2008 = vmatpush1.msra.mxu0 0.0
  %2009 = vmatprep.subr.mxu0 0.0
  %2010 = vmatpush1.msra.mxu0 %v1977
  %2011 = vmatprep.subr.mxu0 0.0
  %2012 = vmatpush2.msra.mxu0 0.0
  %2013 = vmatprep.subr.mxu0 0.0
  %2014 = vmatpush2.msra.mxu0 0.0
  %2015 = vmatprep.subr.mxu0 0.0
  %2016 = vmatpush2.msra.mxu0 0.0
  %2017 = vmatprep.subr.mxu0 0.0
  %2018 = vmatpush2.msra.mxu0 0.0
  %2019 = vmatprep.subr.mxu0 0.0
  %2020 = vmatpush2.msra.mxu0 0.0
  %2021 = vmatprep.subr.mxu0 0.0
  %2022 = vmatpush2.msra.mxu0 0.0
  %2023 = vmatprep.subr.mxu0 0.0
  %2024 = vmatpush2.msra.mxu0 0.0
  %2025 = vmatprep.subr.mxu0 0.0
  %2026 = vmatpush2.msra.mxu0 0.0
  %2027 = vmatprep.subr.mxu0 0.0
  %2028 = vmatpush2.msra.mxu0 0.0
  %2029 = vmatprep.subr.mxu0 0.0
  %2030 = vmatpush2.msra.mxu0 0.0
  %2031 = vmatprep.subr.mxu0 0.0
  %2032 = vmatpush2.msra.mxu0 0.0
  %2033 = vmatprep.subr.mxu0 0.0
  %2034 = vmatpush2.msra.mxu0 0.0
  %2035 = vmatprep.subr.mxu0 0.0
  %2036 = vmatpush2.msra.mxu0 0.0
  %2037 = vmatprep.subr.mxu0 0.0
  %2038 = vmatpush2.msra.mxu0 0.0
  %2039 = vmatprep.subr.mxu0 0.0
  %2040 = vmatpush2.msra.mxu0 0.0
  %2041 = vmatprep.subr.mxu0 0.0
  %2042 = vmatpush2.msra.mxu0 0.0
  %2043 = vmatprep.mubr.f32.mxu0 0.0
  %2044 = vmatmul.mubr.f32.gmra.mxu0 %v1973
  %v2045 = vpop.f32.mrf.mxu0
  %v2046 = vadd.f32 0.0, %v2045
  %v2047 = vpop.f32.mrf.mxu0
  %2048 = vdwg.mxu0
  %v2049 = vmax.f32 %v2046, 0.0
  %v2050 = vld [vmem:[%s6] sm:$0xf]
  %v2052 = vsel %vm1972, %v2049, 0
  %v2055 = vsel %vm1975, %v2050, 0
  %2057 = vmatprep.subr.mxu0 0.0
  %2058 = vmatpush1.msra.mxu0 0.0
  %2059 = vmatprep.subr.mxu0 0.0
  %2060 = vmatpush1.msra.mxu0 0.0
  %2061 = vmatprep.subr.mxu0 0.0
  %2062 = vmatpush1.msra.mxu0 0.0
  %2063 = vmatprep.subr.mxu0 0.0
  %2064 = vmatpush1.msra.mxu0 0.0
  %2065 = vmatprep.subr.mxu0 0.0
  %2066 = vmatpush1.msra.mxu0 0.0
  %2067 = vmatprep.subr.mxu0 0.0
  %2068 = vmatpush1.msra.mxu0 0.0
  %2069 = vmatprep.subr.mxu0 0.0
  %2070 = vmatpush1.msra.mxu0 0.0
  %2071 = vmatprep.subr.mxu0 0.0
  %2072 = vmatpush1.msra.mxu0 0.0
  %2073 = vmatprep.subr.mxu0 0.0
  %2074 = vmatpush1.msra.mxu0 0.0
  %2075 = vmatprep.subr.mxu0 0.0
  %2076 = vmatpush1.msra.mxu0 0.0
  %2077 = vmatprep.subr.mxu0 0.0
  %2078 = vmatpush1.msra.mxu0 0.0
  %2079 = vmatprep.subr.mxu0 0.0
  %2080 = vmatpush1.msra.mxu0 0.0
  %2081 = vmatprep.subr.mxu0 0.0
  %2082 = vmatpush1.msra.mxu0 0.0
  %2083 = vmatprep.subr.mxu0 0.0
  %2084 = vmatpush1.msra.mxu0 0.0
  %2085 = vmatprep.subr.mxu0 0.0
  %2086 = vmatpush1.msra.mxu0 0.0
  %2087 = vmatprep.subr.mxu0 0.0
  %2088 = vmatpush1.msra.mxu0 %v2055
  %2089 = vmatprep.subr.mxu0 0.0
  %2090 = vmatpush2.msra.mxu0 0.0
  %2091 = vmatprep.subr.mxu0 0.0
  %2092 = vmatpush2.msra.mxu0 0.0
  %2093 = vmatprep.subr.mxu0 0.0
  %2094 = vmatpush2.msra.mxu0 0.0
  %2095 = vmatprep.subr.mxu0 0.0
  %2096 = vmatpush2.msra.mxu0 0.0
  %2097 = vmatprep.subr.mxu0 0.0
  %2098 = vmatpush2.msra.mxu0 0.0
  %2099 = vmatprep.subr.mxu0 0.0
  %2100 = vmatpush2.msra.mxu0 0.0
  %2101 = vmatprep.subr.mxu0 0.0
  %2102 = vmatpush2.msra.mxu0 0.0
  %2103 = vmatprep.subr.mxu0 0.0
  %2104 = vmatpush2.msra.mxu0 0.0
  %2105 = vmatprep.subr.mxu0 0.0
  %2106 = vmatpush2.msra.mxu0 0.0
  %2107 = vmatprep.subr.mxu0 0.0
  %2108 = vmatpush2.msra.mxu0 0.0
  %2109 = vmatprep.subr.mxu0 0.0
  %2110 = vmatpush2.msra.mxu0 0.0
  %2111 = vmatprep.subr.mxu0 0.0
  %2112 = vmatpush2.msra.mxu0 0.0
  %2113 = vmatprep.subr.mxu0 0.0
  %2114 = vmatpush2.msra.mxu0 0.0
  %2115 = vmatprep.subr.mxu0 0.0
  %2116 = vmatpush2.msra.mxu0 0.0
  %2117 = vmatprep.subr.mxu0 0.0
  %2118 = vmatpush2.msra.mxu0 0.0
  %2119 = vmatprep.subr.mxu0 0.0
  %2120 = vmatpush2.msra.mxu0 0.0
  %2121 = vmatprep.mubr.f32.mxu0 0.0
  %2122 = vmatmul.mubr.f32.gmra.mxu0 %v2052
  %v2123 = vpop.f32.mrf.mxu0
  %v2124 = vadd.f32 0.0, %v2123
  %v2125 = vpop.f32.mrf.mxu0
  %2126 = vdwg.mxu0
  %v2127 = vxor.u32 %v2124, 2147483648
  %v2128 = vmul.f32 %v2127, 1.442695
  %v2129 = vpow.pop %v2128
  %v2130 = vadd.f32 %v2129, 1.0
  %v2131 = vrcp.pop %v2130
  %v2132 = vmul.f32 1.0, %v2131
  %v2133 = vld [vmem:[%s1] sm:$0xff]
  %v2134 = vld [vmem:[%s1 + $0x8] sm:$0xff]
  %v2135 = vlaneseq
  %v2136 = vshrl.u32 %v2135, 7
  %v2137 = vsub.s32 0, %v2136
  %v2138 = vrot.slane %v2132, %v2137
  %2140 = vbcast.lane.b32.xlu0 %v2138, 256
  %v2141 = vpop.permute.xlu0 %2140
  %v2142 = vlaneseq
  %v2143 = vshrl.u32 %v2142, 7
  %v2144 = vsub.s32 1, %v2143
  %v2145 = vrot.slane %v2132, %v2144
  %2147 = vbcast.lane.b32.xlu0 %v2145, 256
  %v2148 = vpop.permute.xlu0 %2147
  %v2152 = vunpack.c.l.s4 839922192
  %v2153 = vunpack.c.0.s8 %v2152
  %v2154 = vlaneseq
  %v2155 = vshrl.u32 %v2154, 7
  %v2156 = vsub.s32 %v2153, %v2155
  %v2157 = vrot.slane %v2141, %v2156
  %v2159 = vunpack.c.l.s4 839922192
  %v2160 = vunpack.c.0.s8 %v2159
  %v2161 = vlaneseq
  %v2162 = vshrl.u32 %v2161, 7
  %v2163 = vsub.s32 %v2160, %v2162
  %v2164 = vrot.slane %v2148, %v2163
  %v2167 = vmul.f32 %v2133, %v2157
  %v2168 = vmul.f32 %v2134, %v2164
  %2169 = vst [vmem:[%s7] sm:$0xff] %v2167
  %2170 = vst [vmem:[%s7 + $0x8] sm:$0xff] %v2168
  // Predicated region
  $region30: #{_sfu_call.1} parent=0 // pred_check
    _
  $region31: #{_sfu_call.1} parent=0 // pred_check_branch
    %2172 = sbr.rel (0) target = $region33
  $region32: #{_sfu_call.1} parent=0 // pred_region
    _
  $region33: #{_sfu_call.1} parent=0 // pred_fallthru
    _
  // Predicated region
  $region34: #{_sfu_call.1} parent=0 // pred_check
    _
  $region35: #{_sfu_call.1} parent=0 // pred_check_branch
    %2174 = sbr.rel (0) target = $region37
  $region36: #{_sfu_call.1} parent=0 // pred_region
    _
  $region37: #{_sfu_call.1} parent=0 // pred_fallthru
    _

</llo_original>
